<compile_context>
chip_gen: v7x
topology: tpu7x:2x2x1
jax: 0.10.0
libtpu: 0.0.40
codegen_flags: <defaults>
</compile_context>

<pallas_src>
import jax
import jax.numpy as jnp
from jax.experimental import pallas as pl
from jax.experimental.pallas import tpu as pltpu


# ---------------------------------------------------------------------------
# Model hyper-parameters (small, consistent with the module's __init__)
# ---------------------------------------------------------------------------
PX = 16                       # number of covariate features
LATENT = 8                    # latent_dim
ENC_SIZES = [PX + 1, 32, 16]  # encoder_layer_sizes (input = concat(x, y))
DEC_SIZES = [32, 16, 1]       # decoder_layer_sizes (input = latent_dim + px)

PAD = 128                     # lane-padded feature width (all dims <= 128)
NW = 8                        # number of packed weight matrices

# Indices into the packed weight/bias slabs.
W_E1, W_E2, W_M, W_V, W_D1Z, W_D1X, W_D2, W_D3 = range(NW)


def _round_up(n, m):
    return ((n + m - 1) // m) * m


# ---------------------------------------------------------------------------
# Fused Pallas kernel: encoder MLP + heads + reparameterize + decoder MLP
# ---------------------------------------------------------------------------
def cvae_kernel(inp_ref, eps_ref, w_ref, b_ref, out_ref):
    inp = inp_ref[...]            # (TB, 128) f32 : [x | y | zeros]
    eps = eps_ref[...]            # (TB, 128) f32 : [eps | zeros]

    def dense(a, idx):
        # bf16 MXU operands, f32 accumulation, f32 bias add.
        return (jnp.dot(a.astype(w_ref.dtype), w_ref[idx],
                        preferred_element_type=jnp.float32)
                + b_ref[idx])                      # (1, 128) broadcast

    # ---- Encoder: h = ReLU(cat(x, y) @ We1 + b1) -> ReLU(h @ We2 + b2) ----
    h = jnp.maximum(dense(inp, W_E1), 0.0)
    h = jnp.maximum(dense(h, W_E2), 0.0)
    mean = dense(h, W_M)          # zero-padded beyond LATENT
    log_var = dense(h, W_V)       # zero-padded beyond LATENT

    # ---- Reparameterize: z = mean + eps * exp(0.5 * log_var)  (all f32) ----
    std = jnp.exp(0.5 * log_var)  # padded lanes: exp(0) = 1
    z = mean + eps * std          # padded lanes: 0 + 0*1 = 0

    # ---- Decoder: d = ReLU(cat(z, x) @ Wd1 + b1) -> ReLU -> linear ----
    d = jnp.maximum(dense(z, W_D1Z) + dense(inp, W_D1X), 0.0)
    d = jnp.maximum(dense(d, W_D2), 0.0)
    recon = dense(d, W_D3)

    # Single lane-dense fused output block (one writeback DMA per tile).
    out_ref[0] = recon
    out_ref[1] = mean
    out_ref[2] = log_var


# ---------------------------------------------------------------------------
# Host wrapper
# ---------------------------------------------------------------------------
def cvae_forward(x, y, eps, packed, *, block_batch=256):
    """Fused CVAE forward.  Returns (recon, mean, log_var)."""
    w_slab, b_slab = packed
    b = x.shape[0]
    tb = min(block_batch, _round_up(b, 8))
    b_pad = _round_up(b, tb)

    # Lane-dense padded input slabs (padding rows/cols are exact zeros).
    inp = jnp.zeros((b_pad, PAD), jnp.float32)
    inp = inp.at[:b, :PX].set(x.astype(jnp.float32))
    inp = inp.at[:b, PX:PX + 1].set(y.astype(jnp.float32))
    eps_pad = jnp.zeros((b_pad, PAD), jnp.float32)
    eps_pad = eps_pad.at[:b, :LATENT].set(eps.astype(jnp.float32))

    grid = (b_pad // tb,)
    out = pl.pallas_call(
        cvae_kernel,
        out_shape=jax.ShapeDtypeStruct((3, b_pad, PAD), jnp.float32),
        grid_spec=pltpu.PrefetchScalarGridSpec(
            num_scalar_prefetch=0,
            grid=grid,
            in_specs=[
                pl.BlockSpec((tb, PAD), lambda i: (i, 0)),        # input slab
                pl.BlockSpec((tb, PAD), lambda i: (i, 0)),        # eps slab
                pl.BlockSpec((NW, PAD, PAD), lambda i: (0, 0, 0)),  # weights (resident)
                pl.BlockSpec((NW, 1, PAD), lambda i: (0, 0, 0)),    # biases (resident)
            ],
            out_specs=pl.BlockSpec((3, tb, PAD), lambda i: (0, i, 0)),
        ),
        compiler_params=pltpu.CompilerParams(
            dimension_semantics=("parallel",),   # megacore batch sharding (v7x)
        ),
    )(inp, eps_pad, w_slab, b_slab)

    recon = out[0, :b, :DEC_SIZES[-1]]
    mean = out[1, :b, :LATENT]
    log_var = out[2, :b, :LATENT]
    return recon, mean, log_var


# ---------------------------------------------------------------------------
# Deterministic parameter initialization (synthetic weights, no checkpoint)
# ---------------------------------------------------------------------------
def init_params(key):
    def lin(k, fan_in, fan_out):
        kw, kb = jax.random.split(k)
        scale = 1.0 / jnp.sqrt(jnp.float32(fan_in))
        w = jax.random.uniform(kw, (fan_in, fan_out), jnp.float32, -scale, scale)
        b = jax.random.uniform(kb, (1, fan_out), jnp.float32, -scale, scale)
        return w, b

    keys = jax.random.split(key, 8)
    # Encoder layer 1: input = PX + 1 (concat of x and y); split the weight.
    we1, be1 = lin(keys[0], ENC_SIZES[0], ENC_SIZES[1])
    we1x, we1y = we1[:PX, :], we1[PX:, :]
    we2, be2 = lin(keys[1], ENC_SIZES[1], ENC_SIZES[2])
    wm, bm = lin(keys[2], ENC_SIZES[2], LATENT)
    wv, bv = lin(keys[3], ENC_SIZES[2], LATENT)
    # Decoder layer 1: input = LATENT + PX (concat of z and x); split the weight.
    wd1, bd1 = lin(keys[4], LATENT + PX, DEC_SIZES[0])
    wd1z, wd1x = wd1[:LATENT, :], wd1[LATENT:, :]
    wd2, bd2 = lin(keys[5], DEC_SIZES[0], DEC_SIZES[1])
    wd3, bd3 = lin(keys[6], DEC_SIZES[1], DEC_SIZES[2])
    return (we1x, we1y, be1, we2, be2, wm, bm, wv, bv,
            wd1z, wd1x, bd1, wd2, bd2, wd3, bd3)


def pack_params(params, weight_dtype=jnp.bfloat16):
    """Pack the 16 tensors into one zero-padded weight slab and one bias slab."""
    (we1x, we1y, be1, we2, be2, wm, bm, wv, bv,
     wd1z, wd1x, bd1, wd2, bd2, wd3, bd3) = params
    h1, h2 = ENC_SIZES[1], ENC_SIZES[2]
    d1, d2, dout = DEC_SIZES

    w = jnp.zeros((NW, PAD, PAD), jnp.float32)
    b = jnp.zeros((NW, 1, PAD), jnp.float32)

    # Encoder layer 1 consumes the [x | y] slab: rows 0:PX = Wx, row PX = Wy.
    w = w.at[W_E1, :PX, :h1].set(we1x)
    w = w.at[W_E1, PX:PX + 1, :h1].set(we1y)
    b = b.at[W_E1, 0, :h1].set(be1[0])

    w = w.at[W_E2, :h1, :h2].set(we2)
    b = b.at[W_E2, 0, :h2].set(be2[0])

    w = w.at[W_M, :h2, :LATENT].set(wm)
    b = b.at[W_M, 0, :LATENT].set(bm[0])

    w = w.at[W_V, :h2, :LATENT].set(wv)
    b = b.at[W_V, 0, :LATENT].set(bv[0])

    # Decoder layer 1 = z-path (carries the bias) + x-path (zero bias).
    w = w.at[W_D1Z, :LATENT, :d1].set(wd1z)
    b = b.at[W_D1Z, 0, :d1].set(bd1[0])
    w = w.at[W_D1X, :PX, :d1].set(wd1x)

    w = w.at[W_D2, :d1, :d2].set(wd2)
    b = b.at[W_D2, 0, :d2].set(bd2[0])

    w = w.at[W_D3, :d2, :dout].set(wd3)
    b = b.at[W_D3, 0, :dout].set(bd3[0])

    return w.astype(weight_dtype), b


def reference_forward(x, y, eps, params, weight_dtype=jnp.bfloat16):
    """Pure-JAX reference with the same bf16-operand / f32-accumulate matmuls."""
    (we1x, we1y, be1, we2, be2, wm, bm, wv, bv,
     wd1z, wd1x, bd1, wd2, bd2, wd3, bd3) = params

    def mm(a, w):
        return jnp.dot(a.astype(weight_dtype), w.astype(weight_dtype),
                       preferred_element_type=jnp.float32)

    h = jnp.maximum(mm(x, we1x) + mm(y, we1y) + be1, 0.0)
    h = jnp.maximum(mm(h, we2) + be2, 0.0)
    mean = mm(h, wm) + bm
    log_var = mm(h, wv) + bv
    z = mean + eps * jnp.exp(0.5 * log_var)
    d = jnp.maximum(mm(z, wd1z) + mm(x, wd1x) + bd1, 0.0)
    d = jnp.maximum(mm(d, wd2) + bd2, 0.0)
    recon = mm(d, wd3) + bd3
    return recon, mean, log_var


# TODO(synk): validate()/test() (Gumbel logsf, quantiles, EvalSurv concordance)
# are evaluation utilities outside the forward pass and are not ported; eps is
# passed from the host (jax.random) instead of torch.randn_like for determinism.

if __name__ == "__main__":
    key = jax.random.PRNGKey(0)
    k_x, k_y, k_eps, k_p = jax.random.split(key, 4)

    batch = 512  # tiled over the batch grid: TB=256 -> grid=(2,)
    x = jax.random.normal(k_x, (batch, PX), jnp.float32)
    y = jax.random.normal(k_y, (batch, 1), jnp.float32)
    eps = jax.random.normal(k_eps, (batch, LATENT), jnp.float32)
    params = init_params(k_p)
    packed = pack_params(params, weight_dtype=jnp.bfloat16)

    recon, mean, log_var = cvae_forward(x, y, eps, packed, block_batch=256)
    jax.block_until_ready((recon, mean, log_var))

    r_ref, m_ref, lv_ref = reference_forward(x, y, eps, params,
                                             weight_dtype=jnp.bfloat16)
    assert recon.shape == (batch, DEC_SIZES[-1])
    assert mean.shape == (batch, LATENT) and log_var.shape == (batch, LATENT)
    assert jnp.allclose(recon, r_ref, atol=1e-3, rtol=1e-3)
    assert jnp.allclose(mean, m_ref, atol=1e-3, rtol=1e-3)
    assert jnp.allclose(log_var, lv_ref, atol=1e-3, rtol=1e-3)

    # Small / ragged batch path (batch padded up to a multiple of 8 internally).
    recon_s, mean_s, logvar_s = cvae_forward(x[:8], y[:8], eps[:8], packed)
    jax.block_until_ready((recon_s, mean_s, logvar_s))
    assert jnp.allclose(recon_s, r_ref[:8], atol=1e-3, rtol=1e-3)

    print("KERNEL_OK")
</pallas_src>

<mosaic_0001>
module attributes {stable_mosaic.version = 11 : i64} {
  func.func @cvae_kernel(%arg0: i32, %arg1: memref<256x128xf32, #tpu.memory_space<vmem>>, %arg2: memref<256x128xf32, #tpu.memory_space<vmem>>, %arg3: memref<8x128x128xbf16, #tpu.memory_space<vmem>>, %arg4: memref<8x1x128xf32, #tpu.memory_space<vmem>>, %arg5: memref<3x256x128xf32, #tpu.memory_space<vmem>>) attributes {dimension_semantics = [#tpu.dimension_semantics<parallel>], iteration_bounds = array<i64: 2>, scalar_prefetch = 0 : i64, scratch_operands = 0 : i64, tpu.core_type = #tpu.core_type<tc>, window_params = [{transform_indices = @transform_0, window_bounds = array<i64: 256, 128>}, {transform_indices = @transform_1, window_bounds = array<i64: 256, 128>}, {pipeline_mode = #tpu.pipeline_mode<synchronous>, transform_indices = @transform_2, window_bounds = array<i64: 8, 128, 128>}, {pipeline_mode = #tpu.pipeline_mode<synchronous>, transform_indices = @transform_3, window_bounds = array<i64: 8, 1, 128>}, {transform_indices = @transform_4, window_bounds = array<i64: 3, 256, 128>}]} {
    %c0 = arith.constant 0 : index
    %c0_0 = arith.constant 0 : index
    %0 = vector.load %arg1[%c0, %c0_0] : memref<256x128xf32, #tpu.memory_space<vmem>>, vector<256x128xf32>
    %c0_1 = arith.constant 0 : index
    %c0_2 = arith.constant 0 : index
    %1 = vector.load %arg2[%c0_1, %c0_2] : memref<256x128xf32, #tpu.memory_space<vmem>>, vector<256x128xf32>
    %2 = arith.truncf %0 : vector<256x128xf32> to vector<256x128xbf16>
    %c0_3 = arith.constant 0 : index
    %c0_4 = arith.constant 0 : index
    %c0_5 = arith.constant 0 : index
    %3 = vector.load %arg3[%c0_3, %c0_4, %c0_5] : memref<8x128x128xbf16, #tpu.memory_space<vmem>>, vector<1x128x128xbf16>
    %4 = vector.shape_cast %3 : vector<1x128x128xbf16> to vector<128x128xbf16>
    %cst = arith.constant dense<0.000000e+00> : vector<256x128xf32>
    %5 = tpu.matmul %2, %4, %cst {dimension_numbers = #tpu.dot_dimension_numbers<[1], [0], [0], [1], [0, 0, 1, 1], [], []>} : vector<256x128xbf16>, vector<128x128xbf16>, vector<256x128xf32> -> vector<256x128xf32>
    %c0_6 = arith.constant 0 : index
    %c0_7 = arith.constant 0 : index
    %c0_8 = arith.constant 0 : index
    %6 = vector.load %arg4[%c0_6, %c0_7, %c0_8] : memref<8x1x128xf32, #tpu.memory_space<vmem>>, vector<1x1x128xf32>
    %7 = vector.shape_cast %6 : vector<1x1x128xf32> to vector<1x128xf32>
    %8 = vector.broadcast %7 : vector<1x128xf32> to vector<256x128xf32>
    %9 = arith.addf %5, %8 : vector<256x128xf32>
    %cst_9 = arith.constant 0.000000e+00 : f32
    %10 = vector.broadcast %cst_9 : f32 to vector<256x128xf32>
    %11 = arith.maximumf %9, %10 : vector<256x128xf32>
    %12 = arith.truncf %11 : vector<256x128xf32> to vector<256x128xbf16>
    %c1 = arith.constant 1 : index
    %c0_10 = arith.constant 0 : index
    %c0_11 = arith.constant 0 : index
    %13 = vector.load %arg3[%c1, %c0_10, %c0_11] : memref<8x128x128xbf16, #tpu.memory_space<vmem>>, vector<1x128x128xbf16>
    %14 = vector.shape_cast %13 : vector<1x128x128xbf16> to vector<128x128xbf16>
    %cst_12 = arith.constant dense<0.000000e+00> : vector<256x128xf32>
    %15 = tpu.matmul %12, %14, %cst_12 {dimension_numbers = #tpu.dot_dimension_numbers<[1], [0], [0], [1], [0, 0, 1, 1], [], []>} : vector<256x128xbf16>, vector<128x128xbf16>, vector<256x128xf32> -> vector<256x128xf32>
    %c1_13 = arith.constant 1 : index
    %c0_14 = arith.constant 0 : index
    %c0_15 = arith.constant 0 : index
    %16 = vector.load %arg4[%c1_13, %c0_14, %c0_15] : memref<8x1x128xf32, #tpu.memory_space<vmem>>, vector<1x1x128xf32>
    %17 = vector.shape_cast %16 : vector<1x1x128xf32> to vector<1x128xf32>
    %18 = vector.broadcast %17 : vector<1x128xf32> to vector<256x128xf32>
    %19 = arith.addf %15, %18 : vector<256x128xf32>
    %cst_16 = arith.constant 0.000000e+00 : f32
    %20 = vector.broadcast %cst_16 : f32 to vector<256x128xf32>
    %21 = arith.maximumf %19, %20 : vector<256x128xf32>
    %22 = arith.truncf %21 : vector<256x128xf32> to vector<256x128xbf16>
    %c2 = arith.constant 2 : index
    %c0_17 = arith.constant 0 : index
    %c0_18 = arith.constant 0 : index
    %23 = vector.load %arg3[%c2, %c0_17, %c0_18] : memref<8x128x128xbf16, #tpu.memory_space<vmem>>, vector<1x128x128xbf16>
    %24 = vector.shape_cast %23 : vector<1x128x128xbf16> to vector<128x128xbf16>
    %cst_19 = arith.constant dense<0.000000e+00> : vector<256x128xf32>
    %25 = tpu.matmul %22, %24, %cst_19 {dimension_numbers = #tpu.dot_dimension_numbers<[1], [0], [0], [1], [0, 0, 1, 1], [], []>} : vector<256x128xbf16>, vector<128x128xbf16>, vector<256x128xf32> -> vector<256x128xf32>
    %c2_20 = arith.constant 2 : index
    %c0_21 = arith.constant 0 : index
    %c0_22 = arith.constant 0 : index
    %26 = vector.load %arg4[%c2_20, %c0_21, %c0_22] : memref<8x1x128xf32, #tpu.memory_space<vmem>>, vector<1x1x128xf32>
    %27 = vector.shape_cast %26 : vector<1x1x128xf32> to vector<1x128xf32>
    %28 = vector.broadcast %27 : vector<1x128xf32> to vector<256x128xf32>
    %29 = arith.addf %25, %28 : vector<256x128xf32>
    %30 = arith.truncf %21 : vector<256x128xf32> to vector<256x128xbf16>
    %c3 = arith.constant 3 : index
    %c0_23 = arith.constant 0 : index
    %c0_24 = arith.constant 0 : index
    %31 = vector.load %arg3[%c3, %c0_23, %c0_24] : memref<8x128x128xbf16, #tpu.memory_space<vmem>>, vector<1x128x128xbf16>
    %32 = vector.shape_cast %31 : vector<1x128x128xbf16> to vector<128x128xbf16>
    %cst_25 = arith.constant dense<0.000000e+00> : vector<256x128xf32>
    %33 = tpu.matmul %30, %32, %cst_25 {dimension_numbers = #tpu.dot_dimension_numbers<[1], [0], [0], [1], [0, 0, 1, 1], [], []>} : vector<256x128xbf16>, vector<128x128xbf16>, vector<256x128xf32> -> vector<256x128xf32>
    %c3_26 = arith.constant 3 : index
    %c0_27 = arith.constant 0 : index
    %c0_28 = arith.constant 0 : index
    %34 = vector.load %arg4[%c3_26, %c0_27, %c0_28] : memref<8x1x128xf32, #tpu.memory_space<vmem>>, vector<1x1x128xf32>
    %35 = vector.shape_cast %34 : vector<1x1x128xf32> to vector<1x128xf32>
    %36 = vector.broadcast %35 : vector<1x128xf32> to vector<256x128xf32>
    %37 = arith.addf %33, %36 : vector<256x128xf32>
    %cst_29 = arith.constant 5.000000e-01 : f32
    %38 = vector.broadcast %cst_29 : f32 to vector<256x128xf32>
    %39 = arith.mulf %38, %37 : vector<256x128xf32>
    %40 = math.exp %39 : vector<256x128xf32>
    %41 = arith.mulf %1, %40 : vector<256x128xf32>
    %42 = arith.addf %29, %41 : vector<256x128xf32>
    %43 = arith.truncf %42 : vector<256x128xf32> to vector<256x128xbf16>
    %c4 = arith.constant 4 : index
    %c0_30 = arith.constant 0 : index
    %c0_31 = arith.constant 0 : index
    %44 = vector.load %arg3[%c4, %c0_30, %c0_31] : memref<8x128x128xbf16, #tpu.memory_space<vmem>>, vector<1x128x128xbf16>
    %45 = vector.shape_cast %44 : vector<1x128x128xbf16> to vector<128x128xbf16>
    %cst_32 = arith.constant dense<0.000000e+00> : vector<256x128xf32>
    %46 = tpu.matmul %43, %45, %cst_32 {dimension_numbers = #tpu.dot_dimension_numbers<[1], [0], [0], [1], [0, 0, 1, 1], [], []>} : vector<256x128xbf16>, vector<128x128xbf16>, vector<256x128xf32> -> vector<256x128xf32>
    %c4_33 = arith.constant 4 : index
    %c0_34 = arith.constant 0 : index
    %c0_35 = arith.constant 0 : index
    %47 = vector.load %arg4[%c4_33, %c0_34, %c0_35] : memref<8x1x128xf32, #tpu.memory_space<vmem>>, vector<1x1x128xf32>
    %48 = vector.shape_cast %47 : vector<1x1x128xf32> to vector<1x128xf32>
    %49 = vector.broadcast %48 : vector<1x128xf32> to vector<256x128xf32>
    %50 = arith.addf %46, %49 : vector<256x128xf32>
    %51 = arith.truncf %0 : vector<256x128xf32> to vector<256x128xbf16>
    %c5 = arith.constant 5 : index
    %c0_36 = arith.constant 0 : index
    %c0_37 = arith.constant 0 : index
    %52 = vector.load %arg3[%c5, %c0_36, %c0_37] : memref<8x128x128xbf16, #tpu.memory_space<vmem>>, vector<1x128x128xbf16>
    %53 = vector.shape_cast %52 : vector<1x128x128xbf16> to vector<128x128xbf16>
    %cst_38 = arith.constant dense<0.000000e+00> : vector<256x128xf32>
    %54 = tpu.matmul %51, %53, %cst_38 {dimension_numbers = #tpu.dot_dimension_numbers<[1], [0], [0], [1], [0, 0, 1, 1], [], []>} : vector<256x128xbf16>, vector<128x128xbf16>, vector<256x128xf32> -> vector<256x128xf32>
    %c5_39 = arith.constant 5 : index
    %c0_40 = arith.constant 0 : index
    %c0_41 = arith.constant 0 : index
    %55 = vector.load %arg4[%c5_39, %c0_40, %c0_41] : memref<8x1x128xf32, #tpu.memory_space<vmem>>, vector<1x1x128xf32>
    %56 = vector.shape_cast %55 : vector<1x1x128xf32> to vector<1x128xf32>
    %57 = vector.broadcast %56 : vector<1x128xf32> to vector<256x128xf32>
    %58 = arith.addf %54, %57 : vector<256x128xf32>
    %59 = arith.addf %50, %58 : vector<256x128xf32>
    %cst_42 = arith.constant 0.000000e+00 : f32
    %60 = vector.broadcast %cst_42 : f32 to vector<256x128xf32>
    %61 = arith.maximumf %59, %60 : vector<256x128xf32>
    %62 = arith.truncf %61 : vector<256x128xf32> to vector<256x128xbf16>
    %c6 = arith.constant 6 : index
    %c0_43 = arith.constant 0 : index
    %c0_44 = arith.constant 0 : index
    %63 = vector.load %arg3[%c6, %c0_43, %c0_44] : memref<8x128x128xbf16, #tpu.memory_space<vmem>>, vector<1x128x128xbf16>
    %64 = vector.shape_cast %63 : vector<1x128x128xbf16> to vector<128x128xbf16>
    %cst_45 = arith.constant dense<0.000000e+00> : vector<256x128xf32>
    %65 = tpu.matmul %62, %64, %cst_45 {dimension_numbers = #tpu.dot_dimension_numbers<[1], [0], [0], [1], [0, 0, 1, 1], [], []>} : vector<256x128xbf16>, vector<128x128xbf16>, vector<256x128xf32> -> vector<256x128xf32>
    %c6_46 = arith.constant 6 : index
    %c0_47 = arith.constant 0 : index
    %c0_48 = arith.constant 0 : index
    %66 = vector.load %arg4[%c6_46, %c0_47, %c0_48] : memref<8x1x128xf32, #tpu.memory_space<vmem>>, vector<1x1x128xf32>
    %67 = vector.shape_cast %66 : vector<1x1x128xf32> to vector<1x128xf32>
    %68 = vector.broadcast %67 : vector<1x128xf32> to vector<256x128xf32>
    %69 = arith.addf %65, %68 : vector<256x128xf32>
    %cst_49 = arith.constant 0.000000e+00 : f32
    %70 = vector.broadcast %cst_49 : f32 to vector<256x128xf32>
    %71 = arith.maximumf %69, %70 : vector<256x128xf32>
    %72 = arith.truncf %71 : vector<256x128xf32> to vector<256x128xbf16>
    %c7 = arith.constant 7 : index
    %c0_50 = arith.constant 0 : index
    %c0_51 = arith.constant 0 : index
    %73 = vector.load %arg3[%c7, %c0_50, %c0_51] : memref<8x128x128xbf16, #tpu.memory_space<vmem>>, vector<1x128x128xbf16>
    %74 = vector.shape_cast %73 : vector<1x128x128xbf16> to vector<128x128xbf16>
    %cst_52 = arith.constant dense<0.000000e+00> : vector<256x128xf32>
    %75 = tpu.matmul %72, %74, %cst_52 {dimension_numbers = #tpu.dot_dimension_numbers<[1], [0], [0], [1], [0, 0, 1, 1], [], []>} : vector<256x128xbf16>, vector<128x128xbf16>, vector<256x128xf32> -> vector<256x128xf32>
    %c7_53 = arith.constant 7 : index
    %c0_54 = arith.constant 0 : index
    %c0_55 = arith.constant 0 : index
    %76 = vector.load %arg4[%c7_53, %c0_54, %c0_55] : memref<8x1x128xf32, #tpu.memory_space<vmem>>, vector<1x1x128xf32>
    %77 = vector.shape_cast %76 : vector<1x1x128xf32> to vector<1x128xf32>
    %78 = vector.broadcast %77 : vector<1x128xf32> to vector<256x128xf32>
    %79 = arith.addf %75, %78 : vector<256x128xf32>
    %c0_56 = arith.constant 0 : index
    %c0_57 = arith.constant 0 : index
    %c0_58 = arith.constant 0 : index
    %80 = vector.load %arg5[%c0_56, %c0_57, %c0_58] : memref<3x256x128xf32, #tpu.memory_space<vmem>>, vector<1x256x128xf32>
    %81 = vector.shape_cast %80 : vector<1x256x128xf32> to vector<256x128xf32>
    %82 = vector.shape_cast %79 : vector<256x128xf32> to vector<1x256x128xf32>
    tpu.vector_store %arg5[%c0_56, %c0_57, %c0_58], %82 {strides = array<i32>} : memref<3x256x128xf32, #tpu.memory_space<vmem>>, vector<1x256x128xf32>,
    %c1_59 = arith.constant 1 : index
    %c0_60 = arith.constant 0 : index
    %c0_61 = arith.constant 0 : index
    %83 = vector.load %arg5[%c1_59, %c0_60, %c0_61] : memref<3x256x128xf32, #tpu.memory_space<vmem>>, vector<1x256x128xf32>
    %84 = vector.shape_cast %83 : vector<1x256x128xf32> to vector<256x128xf32>
    %85 = vector.shape_cast %29 : vector<256x128xf32> to vector<1x256x128xf32>
    tpu.vector_store %arg5[%c1_59, %c0_60, %c0_61], %85 {strides = array<i32>} : memref<3x256x128xf32, #tpu.memory_space<vmem>>, vector<1x256x128xf32>,
    %c2_62 = arith.constant 2 : index
    %c0_63 = arith.constant 0 : index
    %c0_64 = arith.constant 0 : index
    %86 = vector.load %arg5[%c2_62, %c0_63, %c0_64] : memref<3x256x128xf32, #tpu.memory_space<vmem>>, vector<1x256x128xf32>
    %87 = vector.shape_cast %86 : vector<1x256x128xf32> to vector<256x128xf32>
    %88 = vector.shape_cast %37 : vector<256x128xf32> to vector<1x256x128xf32>
    tpu.vector_store %arg5[%c2_62, %c0_63, %c0_64], %88 {strides = array<i32>} : memref<3x256x128xf32, #tpu.memory_space<vmem>>, vector<1x256x128xf32>,
    return
  }
  func.func @transform_0(%arg0: i32) -> (i32, i32) {
    %c0_i32 = arith.constant 0 : i32
    %c0_i32_0 = arith.constant 0 : i32
    return %arg0, %c0_i32 : i32, i32
  }
  func.func @transform_1(%arg0: i32) -> (i32, i32) {
    %c0_i32 = arith.constant 0 : i32
    %c0_i32_0 = arith.constant 0 : i32
    return %arg0, %c0_i32 : i32, i32
  }
  func.func @transform_2(%arg0: i32) -> (i32, i32, i32) {
    %c0_i32 = arith.constant 0 : i32
    %c0_i32_0 = arith.constant 0 : i32
    %c0_i32_1 = arith.constant 0 : i32
    %c0_i32_2 = arith.constant 0 : i32
    return %c0_i32, %c0_i32_0, %c0_i32_1 : i32, i32, i32
  }
  func.func @transform_3(%arg0: i32) -> (i32, i32, i32) {
    %c0_i32 = arith.constant 0 : i32
    %c0_i32_0 = arith.constant 0 : i32
    %c0_i32_1 = arith.constant 0 : i32
    %c0_i32_2 = arith.constant 0 : i32
    return %c0_i32, %c0_i32_0, %c0_i32_1 : i32, i32, i32
  }
  func.func @transform_4(%arg0: i32) -> (i32, i32, i32) {
    %c0_i32 = arith.constant 0 : i32
    %c0_i32_0 = arith.constant 0 : i32
    %c0_i32_1 = arith.constant 0 : i32
    return %c0_i32, %arg0, %c0_i32_0 : i32, i32, i32
  }
}

</mosaic_0001>

<llo_original>
// kernel: tpu_custom_call.1
$region0: #{tpu_custom_call.1}
  #allocation0 [shape = 'u32[]', space=smem, size = 0x4, offset = 0x4, fixed_abs, tag = 'smem constant byte address 0x4 - core index']
  #allocation1 [shape = 'u32[144,128]{1,0:T(1,128)}', space=vmem, size = 0x12000, scoped, tag = 'internal scratch']
  #allocation9 [shape = 's32[]', space=sflag, size = 0x4, offset = 0, fixed_abs, tag = 'sflag constant byte address 0x0 - dummy sync flag']
  %s0 = inlined_call_operand.hbm [shape: f32[512,128], index: 0, kind: input, shape index: {}]
  %s1 = inlined_call_operand.hbm [shape: f32[512,128], index: 1, kind: input, shape index: {}]
  %s2 = inlined_call_operand.hbm [shape: bf16[8,128,128], index: 2, kind: input, shape index: {}]
  %s3 = inlined_call_operand.vmem [shape: f32[8,1,128], index: 3, kind: input, shape index: {}]
  %s4 = inlined_call_operand.hbm [shape: f32[3,512,128], index: 4, kind: output, shape index: {}]
  %s5 = sld [smem:[#allocation0]]
  $region61: #{tpu_custom_call.1} parent=0
    _
  %s7 = ssub.s32 1, %s5
  %s8 = scalar_select 0, %s7, %s5
  $region1: #{tpu_custom_call.1} parent=0
    #allocation2 [shape = 'u8[262144]{0}', space=vmem, size = 0x40000, scoped, tag = 'input window, operand 0']
    #allocation3 [shape = 's32[2]{0}', space=sflag, size = 0x8, scoped, tag = 'scoped memory for tpu_custom_call.1']
    #allocation4 [shape = 's32[2]{0}', space=sflag, size = 0x8, scoped, tag = 'scoped memory for tpu_custom_call.1']
    #allocation5 [shape = 'u8[262144]{0}', space=vmem, size = 0x40000, scoped, tag = 'input window, operand 1']
    #allocation6 [shape = 's32[2]{0}', space=sflag, size = 0x8, scoped, tag = 'scoped memory for tpu_custom_call.1']
    #allocation7 [shape = 'u8[262144]{0}', space=vmem, size = 0x40000, scoped, tag = 'input window, operand 2, single buffered']
    #allocation8 [shape = 'u8[786432]{0}', space=vmem, size = 0xc0000, scoped, tag = 'output window, operand 0']
    %9 = vsyncpa [#allocation3], 0
    %s10 = scalar_lea.sflag [#allocation3], 1
    %11 = vsyncpa %s10, 0
    %12 = vsyncpa [#allocation6], 0
    %s13 = scalar_lea.sflag [#allocation6], 1
    %14 = vsyncpa %s13, 0
    %15 = vsyncpa [#allocation4], 0
    %s16 = scalar_lea.sflag [#allocation4], 1
    %17 = vsyncpa %s16, 0
    loop: start=0, step=1, limit=4
    $region2: #{tpu_custom_call.1} parent=1 // loop_pre_header
      _
    $region3: #{tpu_custom_call.1} parent=1 // loop_header
      %s19 = sphi 0, %s23
      %p20 = scmp.ge.s32.totalorder %s19, 4
      %s29 = sphi 0, %s31
      %s32 = sphi 0, %s29
      %s33 = sphi 0, %s32
      %s49 = sphi 0, %s33
      %s55 = sphi 0, %s57
      %s58 = sphi 0, %s55
      %s59 = sphi 0, %s58
      %s75 = sphi 0, %s59
      %s79 = sphi 0, %s79
      %s81 = sphi 0, %s79
      %s82 = sphi 0, %s81
      %s96 = sphi 0, %s82
      %s100 = sphi 0, %s100
      %s102 = sphi 0, %s100
      %s103 = sphi 0, %s102
      %s117 = sphi 0, %s103
      %s123 = sphi 0, %s125
      %s126 = sphi 0, %s123
      %s127 = sphi 0, %s126
      %s143 = sphi 0, %s127
    $region4: #{tpu_custom_call.1} parent=1 // loop_header_branch
      %22 = sbr.rel (%p20) target = $region8
    $region5: #{tpu_custom_call.1} parent=1 // loop_body
      %s24 = ssub.s32 %s19, 1
      %s25 = ssub.s32 %s19, 2
      %s26 = sadd.s32 %s19, 1
      %s27 = ssub.s32 %s19, %s26
      %p28 = scmp.eq.s32.totalorder %s27, 0
      %s30 = sadd.s32 %s29, 1
      %s31 = scalar_select %p28, %s29, %s30
      %p34 = pneg %p28
      %p35 = scmp.eq.s32.totalorder %s19, 1
      %p36 = por %p34, %p35
      %p37 = scmp.ne.s32.totalorder %s29, %s32
      %p38 = scmp.eq.s32.totalorder %s19, 0
      %p39 = por %p37, %p38
      %p40 = scmp.ne.s32.totalorder %s29, %s32
      %p41 = scmp.eq.s32.totalorder %s24, 1
      %p42 = por %p40, %p41
      %p43 = scmp.ne.s32.totalorder %s32, %s33
      %p44 = scmp.eq.s32.totalorder %s24, 0
      %p45 = por %p43, %p44
      %p46 = scmp.ne.s32.totalorder %s32, %s33
      %p47 = scmp.eq.s32.totalorder %s25, 1
      %p48 = por %p46, %p47
      %p50 = scmp.ne.s32.totalorder %s33, %s49
      %p51 = scmp.eq.s32.totalorder %s25, 0
      %p52 = por %p50, %p51
      %s53 = ssub.s32 %s19, %s26
      %p54 = scmp.eq.s32.totalorder %s53, 0
      %s56 = sadd.s32 %s55, 1
      %s57 = scalar_select %p54, %s55, %s56
      %p60 = pneg %p54
      %p61 = scmp.eq.s32.totalorder %s19, 1
      %p62 = por %p60, %p61
      %p63 = scmp.ne.s32.totalorder %s55, %s58
      %p64 = scmp.eq.s32.totalorder %s19, 0
      %p65 = por %p63, %p64
      %p66 = scmp.ne.s32.totalorder %s55, %s58
      %p67 = scmp.eq.s32.totalorder %s24, 1
      %p68 = por %p66, %p67
      %p69 = scmp.ne.s32.totalorder %s58, %s59
      %p70 = scmp.eq.s32.totalorder %s24, 0
      %p71 = por %p69, %p70
      %p72 = scmp.ne.s32.totalorder %s58, %s59
      %p73 = scmp.eq.s32.totalorder %s25, 1
      %p74 = por %p72, %p73
      %p76 = scmp.ne.s32.totalorder %s59, %s75
      %p77 = scmp.eq.s32.totalorder %s25, 0
      %p78 = por %p76, %p77
      %s80 = sadd.s32 %s79, 1
      %p83 = scmp.eq.s32.totalorder %s19, 1
      %p84 = scmp.ne.s32.totalorder %s79, %s81
      %p85 = scmp.eq.s32.totalorder %s19, 0
      %p86 = por %p84, %p85
      %p87 = scmp.ne.s32.totalorder %s79, %s81
      %p88 = scmp.eq.s32.totalorder %s24, 1
      %p89 = por %p87, %p88
      %p90 = scmp.ne.s32.totalorder %s81, %s82
      %p91 = scmp.eq.s32.totalorder %s24, 0
      %p92 = por %p90, %p91
      %p93 = scmp.ne.s32.totalorder %s81, %s82
      %p94 = scmp.eq.s32.totalorder %s25, 1
      %p95 = por %p93, %p94
      %p97 = scmp.ne.s32.totalorder %s82, %s96
      %p98 = scmp.eq.s32.totalorder %s25, 0
      %p99 = por %p97, %p98
      %s101 = sadd.s32 %s100, 1
      %p104 = scmp.eq.s32.totalorder %s19, 1
      %p105 = scmp.ne.s32.totalorder %s100, %s102
      %p106 = scmp.eq.s32.totalorder %s19, 0
      %p107 = por %p105, %p106
      %p108 = scmp.ne.s32.totalorder %s100, %s102
      %p109 = scmp.eq.s32.totalorder %s24, 1
      %p110 = por %p108, %p109
      %p111 = scmp.ne.s32.totalorder %s102, %s103
      %p112 = scmp.eq.s32.totalorder %s24, 0
      %p113 = por %p111, %p112
      %p114 = scmp.ne.s32.totalorder %s102, %s103
      %p115 = scmp.eq.s32.totalorder %s25, 1
      %p116 = por %p114, %p115
      %p118 = scmp.ne.s32.totalorder %s103, %s117
      %p119 = scmp.eq.s32.totalorder %s25, 0
      %p120 = por %p118, %p119
      %s121 = ssub.s32 %s19, %s26
      %p122 = scmp.eq.s32.totalorder %s121, 0
      %s124 = sadd.s32 %s123, 1
      %s125 = scalar_select %p122, %s123, %s124
      %p128 = pneg %p122
      %p129 = scmp.eq.s32.totalorder %s19, 1
      %p130 = por %p128, %p129
      %p131 = scmp.ne.s32.totalorder %s123, %s126
      %p132 = scmp.eq.s32.totalorder %s19, 0
      %p133 = por %p131, %p132
      %p134 = scmp.ne.s32.totalorder %s123, %s126
      %p135 = scmp.eq.s32.totalorder %s24, 1
      %p136 = por %p134, %p135
      %p137 = scmp.ne.s32.totalorder %s126, %s127
      %p138 = scmp.eq.s32.totalorder %s24, 0
      %p139 = por %p137, %p138
      %p140 = scmp.ne.s32.totalorder %s126, %s127
      %p141 = scmp.eq.s32.totalorder %s25, 1
      %p142 = por %p140, %p141
      %p144 = scmp.ne.s32.totalorder %s127, %s143
      %p145 = scmp.eq.s32.totalorder %s25, 0
      %p146 = por %p144, %p145
      %p147 = scmp.le.s32.totalorder 1, %s19
      %p148 = scmp.lt.s32.totalorder %s19, 3
      %p149 = pnand %p147, %p148
      %p150 = pneg %p149
      // Predicated region
      $region9: #{tpu_custom_call.1} parent=5 // pred_check
        _
      $region10: #{tpu_custom_call.1} parent=5 // pred_check_branch
        %152 = sbr.rel (%p149) target = $region12
      $region11: #{tpu_custom_call.1} parent=5 // pred_region
        %s153 = ssub.s32 %s19, 1
        // Predicated region
        $region13: #{tpu_custom_call.1} parent=11 // pred_check
          %p154 = pneg %p92
        $region14: #{tpu_custom_call.1} parent=11 // pred_check_branch
          %156 = sbr.rel (%p154) target = $region16
        $region15: #{tpu_custom_call.1} parent=11 // pred_region
          %s158 = ssub.s32 8192, 8192
          %159 = vsyncadd [#allocation6], %s158
          %s160 = sshll.u32 [#allocation7], 4
          %s161 = int_to_ptr.vmem [resolvable:$true] %s160
          %166 = dma.hbm_to_vmem [thread:$0]  %s2, 8192, %s161, [#allocation6], 64, 64, 4
        $region16: #{tpu_custom_call.1} parent=11 // pred_fallthru
          _
        // Predicated region
        $region17: #{tpu_custom_call.1} parent=11 // pred_check
          %p167 = pneg %p113
        $region18: #{tpu_custom_call.1} parent=11 // pred_check_branch
          %169 = sbr.rel (%p167) target = $region20
        $region19: #{tpu_custom_call.1} parent=11 // pred_region
          _
        $region20: #{tpu_custom_call.1} parent=11 // pred_fallthru
          _
      $region12: #{tpu_custom_call.1} parent=5 // pred_fallthru
        _
      %p170 = scmp.lt.s32.totalorder %s19, 2
      // Predicated region
      $region21: #{tpu_custom_call.1} parent=5 // pred_check
        %p171 = pneg %p170
      $region22: #{tpu_custom_call.1} parent=5 // pred_check_branch
        %173 = sbr.rel (%p171) target = $region24
      $region23: #{tpu_custom_call.1} parent=5 // pred_region
        // Predicated region
        $region25: #{tpu_custom_call.1} parent=23 // pred_check
          %p174 = pneg %p39
        $region26: #{tpu_custom_call.1} parent=23 // pred_check_branch
          %176 = sbr.rel (%p174) target = $region28
        $region27: #{tpu_custom_call.1} parent=23 // pred_region
          %s177 = sand.u32 %s29, 1
          %s178 = scalar_lea.sflag [#allocation3], %s177
          %s179 = sand.u32 %s29, 1
          %s180 = smul.addr %s179, 256
          %s181 = scalar_lea.vmem [#allocation2], %s180
          %s182 = smul.u32 32, %s19
          %s184 = ssub.s32 4096, 4096
          %185 = vsyncadd %s178, %s184
          %s186 = smul.addr %s182, 128
          %s187 = scalar_lea.hbm %s0, %s186
          %s188 = sshll.u32 %s181, 4
          %s189 = int_to_ptr.vmem [resolvable:$true] %s188
          %194 = dma.hbm_to_vmem [thread:$0]  %s187, 4096, %s189, %s178, 128, 128, 8
        $region28: #{tpu_custom_call.1} parent=23 // pred_fallthru
          _
        // Predicated region
        $region29: #{tpu_custom_call.1} parent=23 // pred_check
          %p195 = pneg %p65
        $region30: #{tpu_custom_call.1} parent=23 // pred_check_branch
          %197 = sbr.rel (%p195) target = $region32
        $region31: #{tpu_custom_call.1} parent=23 // pred_region
          %s198 = sand.u32 %s19, 1
          %s199 = scalar_lea.sflag [#allocation6], %s198
          %s200 = sand.u32 %s55, 1
          %s201 = smul.addr %s200, 256
          %s202 = scalar_lea.vmem [#allocation5], %s201
          %s203 = smul.u32 32, %s19
          %s205 = ssub.s32 4096, 4096
          %206 = vsyncadd %s199, %s205
          %s207 = smul.addr %s203, 128
          %s208 = scalar_lea.hbm %s1, %s207
          %s209 = sshll.u32 %s202, 4
          %s210 = int_to_ptr.vmem [resolvable:$true] %s209
          %215 = dma.hbm_to_vmem [thread:$0]  %s208, 4096, %s210, %s199, 128, 128, 8
        $region32: #{tpu_custom_call.1} parent=23 // pred_fallthru
          _
      $region24: #{tpu_custom_call.1} parent=5 // pred_fallthru
        _
      %p216 = scmp.le.s32.totalorder 1, %s19
      %p217 = scmp.lt.s32.totalorder %s19, 3
      %p218 = pnand %p216, %p217
      %p219 = pneg %p218
      // Predicated region
      $region33: #{tpu_custom_call.1} parent=5 // pred_check
        _
      $region34: #{tpu_custom_call.1} parent=5 // pred_check_branch
        %221 = sbr.rel (%p218) target = $region36
      $region35: #{tpu_custom_call.1} parent=5 // pred_region
        %s222 = ssub.s32 %s19, 1
        %s223 = sand.u32 %s32, 1
        %s224 = scalar_lea.sflag [#allocation3], %s223
        %s225 = sand.u32 %s32, 1
        %s226 = smul.addr %s225, 256
        %s227 = scalar_lea.vmem [#allocation2], %s226
        // Predicated region
        $region37: #{tpu_custom_call.1} parent=35 // pred_check
          %p228 = pneg %p45
        $region38: #{tpu_custom_call.1} parent=35 // pred_check_branch
          %230 = sbr.rel (%p228) target = $region40
        $region39: #{tpu_custom_call.1} parent=35 // pred_region
          %231 = dma.done %s224, 4096
        $region40: #{tpu_custom_call.1} parent=35 // pred_fallthru
          _
        %s232 = sand.u32 %s24, 1
        %s233 = scalar_lea.sflag [#allocation6], %s232
        %s234 = sand.u32 %s58, 1
        %s235 = smul.addr %s234, 256
        %s236 = scalar_lea.vmem [#allocation5], %s235
        // Predicated region
        $region41: #{tpu_custom_call.1} parent=35 // pred_check
          %p237 = pneg %p71
        $region42: #{tpu_custom_call.1} parent=35 // pred_check_branch
          %239 = sbr.rel (%p237) target = $region44
        $region43: #{tpu_custom_call.1} parent=35 // pred_region
          %240 = dma.done %s233, 4096
        $region44: #{tpu_custom_call.1} parent=35 // pred_fallthru
          _
        // Predicated region
        $region45: #{tpu_custom_call.1} parent=35 // pred_check
          %p241 = pneg %p92
        $region46: #{tpu_custom_call.1} parent=35 // pred_check_branch
          %243 = sbr.rel (%p241) target = $region48
        $region47: #{tpu_custom_call.1} parent=35 // pred_region
          %244 = dma.done [#allocation6], 8192
        $region48: #{tpu_custom_call.1} parent=35 // pred_fallthru
          _
        %s245 = sand.u32 %s32, 1
        %s246 = scalar_lea.sflag [#allocation3], %s245
        %s247 = sand.u32 %s32, 1
        %s248 = smul.addr %s247, 256
        %s249 = scalar_lea.vmem [#allocation2], %s248
        %p250 = pneg %p45
        %p251 = pneg %p42
        %s252 = sand.u32 %s24, 1
        %s253 = scalar_lea.sflag [#allocation6], %s252
        %s254 = sand.u32 %s58, 1
        %s255 = smul.addr %s254, 256
        %s256 = scalar_lea.vmem [#allocation5], %s255
        %p257 = pneg %p71
        %p258 = pneg %p68
        %p259 = pneg %p92
        %p260 = pneg %p89
        %p261 = pneg %p113
        %p262 = pneg %p110
        %p263 = pneg %p139
        %p264 = pneg %p136
        %s265 = sand.u32 %s126, 1
        %s266 = scalar_lea.sflag [#allocation4], %s265
        %s267 = sand.u32 %s126, 1
        %s268 = smul.addr %s267, 768
        %s269 = scalar_lea.vmem [#allocation8], %s268
        %s270 = smul.u32 32, %s24
        %s271 = smul.u32 32, %s24
        %s272 = smul.u32 32, %s24
        %v274 = vld [vmem:[%s227] sm:$0xff]
        %v275 = vld [vmem:[%s227 + $0x8] sm:$0xff]
        %v276 = vld [vmem:[%s227 + $0x10] sm:$0xff]
        %v277 = vld [vmem:[%s227 + $0x18] sm:$0xff]
        %v278 = vld [vmem:[%s227 + $0x20] sm:$0xff]
        %v279 = vld [vmem:[%s227 + $0x28] sm:$0xff]
        %v280 = vld [vmem:[%s227 + $0x30] sm:$0xff]
        %v281 = vld [vmem:[%s227 + $0x38] sm:$0xff]
        %v282 = vld [vmem:[%s227 + $0x40] sm:$0xff]
        %v283 = vld [vmem:[%s227 + $0x48] sm:$0xff]
        %v284 = vld [vmem:[%s227 + $0x50] sm:$0xff]
        %v285 = vld [vmem:[%s227 + $0x58] sm:$0xff]
        %v286 = vld [vmem:[%s227 + $0x60] sm:$0xff]
        %v287 = vld [vmem:[%s227 + $0x68] sm:$0xff]
        %v288 = vld [vmem:[%s227 + $0x70] sm:$0xff]
        %v289 = vld [vmem:[%s227 + $0x78] sm:$0xff]
        %v290 = vld [vmem:[%s227 + $0x80] sm:$0xff]
        %v291 = vld [vmem:[%s227 + $0x88] sm:$0xff]
        %v292 = vld [vmem:[%s227 + $0x90] sm:$0xff]
        %v293 = vld [vmem:[%s227 + $0x98] sm:$0xff]
        %v294 = vld [vmem:[%s227 + $0xa0] sm:$0xff]
        %v295 = vld [vmem:[%s227 + $0xa8] sm:$0xff]
        %v296 = vld [vmem:[%s227 + $0xb0] sm:$0xff]
        %v297 = vld [vmem:[%s227 + $0xb8] sm:$0xff]
        %v298 = vld [vmem:[%s227 + $0xc0] sm:$0xff]
        %v299 = vld [vmem:[%s227 + $0xc8] sm:$0xff]
        %v300 = vld [vmem:[%s227 + $0xd0] sm:$0xff]
        %v301 = vld [vmem:[%s227 + $0xd8] sm:$0xff]
        %v302 = vld [vmem:[%s227 + $0xe0] sm:$0xff]
        %v303 = vld [vmem:[%s227 + $0xe8] sm:$0xff]
        %v304 = vld [vmem:[%s227 + $0xf0] sm:$0xff]
        %v305 = vld [vmem:[%s227 + $0xf8] sm:$0xff]
        %v306 = vld [vmem:[%s236] sm:$0xff]
        %v307 = vld [vmem:[%s236 + $0x8] sm:$0xff]
        %v308 = vld [vmem:[%s236 + $0x10] sm:$0xff]
        %v309 = vld [vmem:[%s236 + $0x18] sm:$0xff]
        %v310 = vld [vmem:[%s236 + $0x20] sm:$0xff]
        %v311 = vld [vmem:[%s236 + $0x28] sm:$0xff]
        %v312 = vld [vmem:[%s236 + $0x30] sm:$0xff]
        %v313 = vld [vmem:[%s236 + $0x38] sm:$0xff]
        %v314 = vld [vmem:[%s236 + $0x40] sm:$0xff]
        %v315 = vld [vmem:[%s236 + $0x48] sm:$0xff]
        %v316 = vld [vmem:[%s236 + $0x50] sm:$0xff]
        %v317 = vld [vmem:[%s236 + $0x58] sm:$0xff]
        %v318 = vld [vmem:[%s236 + $0x60] sm:$0xff]
        %v319 = vld [vmem:[%s236 + $0x68] sm:$0xff]
        %v320 = vld [vmem:[%s236 + $0x70] sm:$0xff]
        %v321 = vld [vmem:[%s236 + $0x78] sm:$0xff]
        %v322 = vld [vmem:[%s236 + $0x80] sm:$0xff]
        %v323 = vld [vmem:[%s236 + $0x88] sm:$0xff]
        %v324 = vld [vmem:[%s236 + $0x90] sm:$0xff]
        %v325 = vld [vmem:[%s236 + $0x98] sm:$0xff]
        %v326 = vld [vmem:[%s236 + $0xa0] sm:$0xff]
        %v327 = vld [vmem:[%s236 + $0xa8] sm:$0xff]
        %v328 = vld [vmem:[%s236 + $0xb0] sm:$0xff]
        %v329 = vld [vmem:[%s236 + $0xb8] sm:$0xff]
        %v330 = vld [vmem:[%s236 + $0xc0] sm:$0xff]
        %v331 = vld [vmem:[%s236 + $0xc8] sm:$0xff]
        %v332 = vld [vmem:[%s236 + $0xd0] sm:$0xff]
        %v333 = vld [vmem:[%s236 + $0xd8] sm:$0xff]
        %v334 = vld [vmem:[%s236 + $0xe0] sm:$0xff]
        %v335 = vld [vmem:[%s236 + $0xe8] sm:$0xff]
        %v336 = vld [vmem:[%s236 + $0xf0] sm:$0xff]
        %v337 = vld [vmem:[%s236 + $0xf8] sm:$0xff]
        %v338 = vpack.c.bf16 %v275, %v274
        %v339 = vpack.c.bf16 %v277, %v276
        %v340 = vpack.c.bf16 %v279, %v278
        %v341 = vpack.c.bf16 %v281, %v280
        %v342 = vpack.c.bf16 %v283, %v282
        %v343 = vpack.c.bf16 %v285, %v284
        %v344 = vpack.c.bf16 %v287, %v286
        %v345 = vpack.c.bf16 %v289, %v288
        %v346 = vpack.c.bf16 %v291, %v290
        %v347 = vpack.c.bf16 %v293, %v292
        %v348 = vpack.c.bf16 %v295, %v294
        %v349 = vpack.c.bf16 %v297, %v296
        %v350 = vpack.c.bf16 %v299, %v298
        %v351 = vpack.c.bf16 %v301, %v300
        %v352 = vpack.c.bf16 %v303, %v302
        %v353 = vpack.c.bf16 %v305, %v304
        %v354 = vld [vmem:[#allocation7] sm:$0xf]
        %v355 = vld [vmem:[#allocation7 + $0x4] sm:$0xf]
        %v356 = vld [vmem:[#allocation7 + $0x8] sm:$0xf]
        %v357 = vld [vmem:[#allocation7 + $0xc] sm:$0xf]
        %v358 = vld [vmem:[#allocation7 + $0x10] sm:$0xf]
        %v359 = vld [vmem:[#allocation7 + $0x14] sm:$0xf]
        %v360 = vld [vmem:[#allocation7 + $0x18] sm:$0xf]
        %v361 = vld [vmem:[#allocation7 + $0x1c] sm:$0xf]
        %v362 = vld [vmem:[#allocation7 + $0x20] sm:$0xf]
        %v363 = vld [vmem:[#allocation7 + $0x24] sm:$0xf]
        %v364 = vld [vmem:[#allocation7 + $0x28] sm:$0xf]
        %v365 = vld [vmem:[#allocation7 + $0x2c] sm:$0xf]
        %v366 = vld [vmem:[#allocation7 + $0x30] sm:$0xf]
        %v367 = vld [vmem:[#allocation7 + $0x34] sm:$0xf]
        %v368 = vld [vmem:[#allocation7 + $0x38] sm:$0xf]
        %v369 = vld [vmem:[#allocation7 + $0x3c] sm:$0xf]
        %v370 = vld [vmem:[%s3] sm:$0x1]
        %v372 = vlaneseq
        %v373 = vshrl.u32 %v372, 7
        %v374 = vsub.s32 0, %v373
        %v375 = vrot.slane %v370, %v374
        %v393 = vunpack.c.l.b16 %v354
        %v394 = vunpack.c.l.b16 %v355
        %v395 = vunpack.c.l.b16 %v356
        %v396 = vunpack.c.l.b16 %v357
        %v397 = vunpack.c.l.b16 %v358
        %v398 = vunpack.c.l.b16 %v359
        %v399 = vunpack.c.l.b16 %v360
        %v400 = vunpack.c.l.b16 %v361
        %v401 = vunpack.c.l.b16 %v362
        %v402 = vunpack.c.l.b16 %v363
        %v403 = vunpack.c.l.b16 %v364
        %v404 = vunpack.c.l.b16 %v365
        %v405 = vunpack.c.l.b16 %v366
        %v406 = vunpack.c.l.b16 %v367
        %v407 = vunpack.c.l.b16 %v368
        %v408 = vunpack.c.l.b16 %v369
        %v409 = vpack.c.b16 %v394, %v393
        %v410 = vpack.c.b16 %v396, %v395
        %v411 = vpack.c.b16 %v398, %v397
        %v412 = vpack.c.b16 %v400, %v399
        %v413 = vpack.c.b16 %v402, %v401
        %v414 = vpack.c.b16 %v404, %v403
        %v415 = vpack.c.b16 %v406, %v405
        %v416 = vpack.c.b16 %v408, %v407
        %425 = vmatprep.subr.bf16.mxu0 0
        %426 = vmatpush1.bf16.msra.mxu0 %v409
        %427 = vmatprep.subr.bf16.mxu0 0
        %428 = vmatpush1.bf16.msra.mxu0 %v410
        %429 = vmatprep.subr.bf16.mxu0 0
        %430 = vmatpush1.bf16.msra.mxu0 %v411
        %431 = vmatprep.subr.bf16.mxu0 0
        %432 = vmatpush1.bf16.msra.mxu0 %v412
        %433 = vmatprep.subr.bf16.mxu0 0
        %434 = vmatpush1.bf16.msra.mxu0 %v413
        %435 = vmatprep.subr.bf16.mxu0 0
        %436 = vmatpush1.bf16.msra.mxu0 %v414
        %437 = vmatprep.subr.bf16.mxu0 0
        %438 = vmatpush1.bf16.msra.mxu0 %v415
        %439 = vmatprep.subr.bf16.mxu0 0
        %440 = vmatpush1.bf16.msra.mxu0 %v416
        %441 = vmatprep.subr.bf16.mxu0 0
        %442 = vmatpush1.bf16.msra.mxu0 0
        %443 = vmatprep.subr.bf16.mxu0 0
        %444 = vmatpush1.bf16.msra.mxu0 0
        %445 = vmatprep.subr.bf16.mxu0 0
        %446 = vmatpush1.bf16.msra.mxu0 0
        %447 = vmatprep.subr.bf16.mxu0 0
        %448 = vmatpush1.bf16.msra.mxu0 0
        %449 = vmatprep.subr.bf16.mxu0 0
        %450 = vmatpush1.bf16.msra.mxu0 0
        %451 = vmatprep.subr.bf16.mxu0 0
        %452 = vmatpush1.bf16.msra.mxu0 0
        %453 = vmatprep.subr.bf16.mxu0 0
        %454 = vmatpush1.bf16.msra.mxu0 0
        %455 = vmatprep.subr.bf16.mxu0 0
        %456 = vmatpush1.bf16.msra.mxu0 0
        %457 = vmatprep.mubr.bf16.mxu0 0
        %458 = vmatmul.mubr.bf16.gmra.mrb[0].mxu0 %v338
        %v459 = vpop.f32.mrb[0].mxu0
        %v460 = vadd.f32 %v375, %v459
        %v461 = vpop.f32.mrb[0].mxu0
        %v462 = vpop.f32.mrb[0].mxu0
        %v463 = vadd.f32 %v375, %v462
        %v464 = vpop.f32.mrb[0].mxu0
        %465 = vmatprep.mubr.bf16.mxu0 0
        %466 = vmatmul.mubr.bf16.gmra.mrb[0].mxu0 %v339
        %v467 = vpop.f32.mrb[0].mxu0
        %v468 = vadd.f32 %v375, %v467
        %v469 = vpop.f32.mrb[0].mxu0
        %v470 = vpop.f32.mrb[0].mxu0
        %v471 = vadd.f32 %v375, %v470
        %v472 = vpop.f32.mrb[0].mxu0
        %473 = vmatprep.mubr.bf16.mxu0 0
        %474 = vmatmul.mubr.bf16.gmra.mrb[0].mxu0 %v340
        %v475 = vpop.f32.mrb[0].mxu0
        %v476 = vadd.f32 %v375, %v475
        %v477 = vpop.f32.mrb[0].mxu0
        %v478 = vpop.f32.mrb[0].mxu0
        %v479 = vadd.f32 %v375, %v478
        %v480 = vpop.f32.mrb[0].mxu0
        %481 = vmatprep.mubr.bf16.mxu0 0
        %482 = vmatmul.mubr.bf16.gmra.mrb[0].mxu0 %v341
        %v483 = vpop.f32.mrb[0].mxu0
        %v484 = vadd.f32 %v375, %v483
        %v485 = vpop.f32.mrb[0].mxu0
        %v486 = vpop.f32.mrb[0].mxu0
        %v487 = vadd.f32 %v375, %v486
        %v488 = vpop.f32.mrb[0].mxu0
        %489 = vmatprep.mubr.bf16.mxu0 0
        %490 = vmatmul.mubr.bf16.gmra.mrb[0].mxu0 %v342
        %v491 = vpop.f32.mrb[0].mxu0
        %v492 = vadd.f32 %v375, %v491
        %v493 = vpop.f32.mrb[0].mxu0
        %v494 = vpop.f32.mrb[0].mxu0
        %v495 = vadd.f32 %v375, %v494
        %v496 = vpop.f32.mrb[0].mxu0
        %497 = vmatprep.mubr.bf16.mxu0 0
        %498 = vmatmul.mubr.bf16.gmra.mrb[0].mxu0 %v343
        %v499 = vpop.f32.mrb[0].mxu0
        %v500 = vadd.f32 %v375, %v499
        %v501 = vpop.f32.mrb[0].mxu0
        %v502 = vpop.f32.mrb[0].mxu0
        %v503 = vadd.f32 %v375, %v502
        %v504 = vpop.f32.mrb[0].mxu0
        %505 = vmatprep.mubr.bf16.mxu0 0
        %506 = vmatmul.mubr.bf16.gmra.mrb[0].mxu0 %v344
        %v507 = vpop.f32.mrb[0].mxu0
        %v508 = vadd.f32 %v375, %v507
        %v509 = vpop.f32.mrb[0].mxu0
        %v510 = vpop.f32.mrb[0].mxu0
        %v511 = vadd.f32 %v375, %v510
        %v512 = vpop.f32.mrb[0].mxu0
        %513 = vmatprep.mubr.bf16.mxu0 0
        %514 = vmatmul.mubr.bf16.gmra.mrb[0].mxu0 %v345
        %v515 = vpop.f32.mrb[0].mxu0
        %v516 = vadd.f32 %v375, %v515
        %v517 = vpop.f32.mrb[0].mxu0
        %v518 = vpop.f32.mrb[0].mxu0
        %v519 = vadd.f32 %v375, %v518
        %v520 = vpop.f32.mrb[0].mxu0
        %521 = vmatprep.mubr.bf16.mxu0 0
        %522 = vmatmul.mubr.bf16.gmra.mrb[0].mxu0 %v346
        %v523 = vpop.f32.mrb[0].mxu0
        %v524 = vadd.f32 %v375, %v523
        %v525 = vpop.f32.mrb[0].mxu0
        %v526 = vpop.f32.mrb[0].mxu0
        %v527 = vadd.f32 %v375, %v526
        %v528 = vpop.f32.mrb[0].mxu0
        %529 = vmatprep.mubr.bf16.mxu0 0
        %530 = vmatmul.mubr.bf16.gmra.mrb[0].mxu0 %v347
        %v531 = vpop.f32.mrb[0].mxu0
        %v532 = vadd.f32 %v375, %v531
        %v533 = vpop.f32.mrb[0].mxu0
        %v534 = vpop.f32.mrb[0].mxu0
        %v535 = vadd.f32 %v375, %v534
        %v536 = vpop.f32.mrb[0].mxu0
        %537 = vmatprep.mubr.bf16.mxu0 0
        %538 = vmatmul.mubr.bf16.gmra.mrb[0].mxu0 %v348
        %v539 = vpop.f32.mrb[0].mxu0
        %v540 = vadd.f32 %v375, %v539
        %v541 = vpop.f32.mrb[0].mxu0
        %v542 = vpop.f32.mrb[0].mxu0
        %v543 = vadd.f32 %v375, %v542
        %v544 = vpop.f32.mrb[0].mxu0
        %545 = vmatprep.mubr.bf16.mxu0 0
        %546 = vmatmul.mubr.bf16.gmra.mrb[0].mxu0 %v349
        %v547 = vpop.f32.mrb[0].mxu0
        %v548 = vadd.f32 %v375, %v547
        %v549 = vpop.f32.mrb[0].mxu0
        %v550 = vpop.f32.mrb[0].mxu0
        %v551 = vadd.f32 %v375, %v550
        %v552 = vpop.f32.mrb[0].mxu0
        %553 = vmatprep.mubr.bf16.mxu0 0
        %554 = vmatmul.mubr.bf16.gmra.mrb[0].mxu0 %v350
        %v555 = vpop.f32.mrb[0].mxu0
        %v556 = vadd.f32 %v375, %v555
        %v557 = vpop.f32.mrb[0].mxu0
        %v558 = vpop.f32.mrb[0].mxu0
        %v559 = vadd.f32 %v375, %v558
        %v560 = vpop.f32.mrb[0].mxu0
        %561 = vmatprep.mubr.bf16.mxu0 0
        %562 = vmatmul.mubr.bf16.gmra.mrb[0].mxu0 %v351
        %v563 = vpop.f32.mrb[0].mxu0
        %v564 = vadd.f32 %v375, %v563
        %v565 = vpop.f32.mrb[0].mxu0
        %v566 = vpop.f32.mrb[0].mxu0
        %v567 = vadd.f32 %v375, %v566
        %v568 = vpop.f32.mrb[0].mxu0
        %569 = vmatprep.mubr.bf16.mxu0 0
        %570 = vmatmul.mubr.bf16.gmra.mrb[0].mxu0 %v352
        %v571 = vpop.f32.mrb[0].mxu0
        %v572 = vadd.f32 %v375, %v571
        %v573 = vpop.f32.mrb[0].mxu0
        %v574 = vpop.f32.mrb[0].mxu0
        %v575 = vadd.f32 %v375, %v574
        %v576 = vpop.f32.mrb[0].mxu0
        %577 = vmatprep.mubr.bf16.mxu0 0
        %578 = vmatmul.mubr.bf16.gmra.mrb[0].mxu0 %v353
        %v579 = vpop.f32.mrb[0].mxu0
        %v580 = vadd.f32 %v375, %v579
        %v581 = vpop.f32.mrb[0].mxu0
        %v582 = vpop.f32.mrb[0].mxu0
        %v583 = vadd.f32 %v375, %v582
        %v584 = vpop.f32.mrb[0].mxu0
        %585 = vdwg.mxu0
        %v586 = vmax.f32 %v460, 0.0
        %v587 = vmax.f32 %v463, 0.0
        %v588 = vmax.f32 %v468, 0.0
        %v589 = vmax.f32 %v471, 0.0
        %v590 = vmax.f32 %v476, 0.0
        %v591 = vmax.f32 %v479, 0.0
        %v592 = vmax.f32 %v484, 0.0
        %v593 = vmax.f32 %v487, 0.0
        %v594 = vmax.f32 %v492, 0.0
        %v595 = vmax.f32 %v495, 0.0
        %v596 = vmax.f32 %v500, 0.0
        %v597 = vmax.f32 %v503, 0.0
        %v598 = vmax.f32 %v508, 0.0
        %v599 = vmax.f32 %v511, 0.0
        %v600 = vmax.f32 %v516, 0.0
        %v601 = vmax.f32 %v519, 0.0
        %v602 = vmax.f32 %v524, 0.0
        %v603 = vmax.f32 %v527, 0.0
        %v604 = vmax.f32 %v532, 0.0
        %v605 = vmax.f32 %v535, 0.0
        %v606 = vmax.f32 %v540, 0.0
        %v607 = vmax.f32 %v543, 0.0
        %v608 = vmax.f32 %v548, 0.0
        %v609 = vmax.f32 %v551, 0.0
        %v610 = vmax.f32 %v556, 0.0
        %v611 = vmax.f32 %v559, 0.0
        %v612 = vmax.f32 %v564, 0.0
        %v613 = vmax.f32 %v567, 0.0
        %v614 = vmax.f32 %v572, 0.0
        %v615 = vmax.f32 %v575, 0.0
        %v616 = vmax.f32 %v580, 0.0
        %v617 = vmax.f32 %v583, 0.0
        %v618 = vpack.c.bf16 %v587, %v586
        %v619 = vpack.c.bf16 %v589, %v588
        %v620 = vpack.c.bf16 %v591, %v590
        %v621 = vpack.c.bf16 %v593, %v592
        %v622 = vpack.c.bf16 %v595, %v594
        %v623 = vpack.c.bf16 %v597, %v596
        %v624 = vpack.c.bf16 %v599, %v598
        %v625 = vpack.c.bf16 %v601, %v600
        %v626 = vpack.c.bf16 %v603, %v602
        %v627 = vpack.c.bf16 %v605, %v604
        %v628 = vpack.c.bf16 %v607, %v606
        %v629 = vpack.c.bf16 %v609, %v608
        %v630 = vpack.c.bf16 %v611, %v610
        %v631 = vpack.c.bf16 %v613, %v612
        %v632 = vpack.c.bf16 %v615, %v614
        %v633 = vpack.c.bf16 %v617, %v616
        %s634 = scalar_lea.vmem [#allocation7], 64
        %v635 = vld [vmem:[%s634] sm:$0xf]
        %v636 = vld [vmem:[%s634 + $0x4] sm:$0xf]
        %v637 = vld [vmem:[%s634 + $0x8] sm:$0xf]
        %v638 = vld [vmem:[%s634 + $0xc] sm:$0xf]
        %v639 = vld [vmem:[%s634 + $0x10] sm:$0xf]
        %v640 = vld [vmem:[%s634 + $0x14] sm:$0xf]
        %v641 = vld [vmem:[%s634 + $0x18] sm:$0xf]
        %v642 = vld [vmem:[%s634 + $0x1c] sm:$0xf]
        %v643 = vld [vmem:[%s634 + $0x20] sm:$0xf]
        %v644 = vld [vmem:[%s634 + $0x24] sm:$0xf]
        %v645 = vld [vmem:[%s634 + $0x28] sm:$0xf]
        %v646 = vld [vmem:[%s634 + $0x2c] sm:$0xf]
        %v647 = vld [vmem:[%s634 + $0x30] sm:$0xf]
        %v648 = vld [vmem:[%s634 + $0x34] sm:$0xf]
        %v649 = vld [vmem:[%s634 + $0x38] sm:$0xf]
        %v650 = vld [vmem:[%s634 + $0x3c] sm:$0xf]
        %s651 = scalar_lea.vmem %s3, 1
        %v652 = vld [vmem:[%s651] sm:$0x1]
        %v654 = vlaneseq
        %v655 = vshrl.u32 %v654, 7
        %v656 = vsub.s32 0, %v655
        %v657 = vrot.slane %v652, %v656
        %v675 = vunpack.c.l.b16 %v635
        %v676 = vunpack.c.l.b16 %v636
        %v677 = vunpack.c.l.b16 %v637
        %v678 = vunpack.c.l.b16 %v638
        %v679 = vunpack.c.l.b16 %v639
        %v680 = vunpack.c.l.b16 %v640
        %v681 = vunpack.c.l.b16 %v641
        %v682 = vunpack.c.l.b16 %v642
        %v683 = vunpack.c.l.b16 %v643
        %v684 = vunpack.c.l.b16 %v644
        %v685 = vunpack.c.l.b16 %v645
        %v686 = vunpack.c.l.b16 %v646
        %v687 = vunpack.c.l.b16 %v647
        %v688 = vunpack.c.l.b16 %v648
        %v689 = vunpack.c.l.b16 %v649
        %v690 = vunpack.c.l.b16 %v650
        %v691 = vpack.c.b16 %v676, %v675
        %v692 = vpack.c.b16 %v678, %v677
        %v693 = vpack.c.b16 %v680, %v679
        %v694 = vpack.c.b16 %v682, %v681
        %v695 = vpack.c.b16 %v684, %v683
        %v696 = vpack.c.b16 %v686, %v685
        %v697 = vpack.c.b16 %v688, %v687
        %v698 = vpack.c.b16 %v690, %v689
        %707 = vmatprep.subr.bf16.mxu0 0
        %708 = vmatpush1.bf16.msra.mxu0 %v691
        %709 = vmatprep.subr.bf16.mxu0 0
        %710 = vmatpush1.bf16.msra.mxu0 %v692
        %711 = vmatprep.subr.bf16.mxu0 0
        %712 = vmatpush1.bf16.msra.mxu0 %v693
        %713 = vmatprep.subr.bf16.mxu0 0
        %714 = vmatpush1.bf16.msra.mxu0 %v694
        %715 = vmatprep.subr.bf16.mxu0 0
        %716 = vmatpush1.bf16.msra.mxu0 %v695
        %717 = vmatprep.subr.bf16.mxu0 0
        %718 = vmatpush1.bf16.msra.mxu0 %v696
        %719 = vmatprep.subr.bf16.mxu0 0
        %720 = vmatpush1.bf16.msra.mxu0 %v697
        %721 = vmatprep.subr.bf16.mxu0 0
        %722 = vmatpush1.bf16.msra.mxu0 %v698
        %723 = vmatprep.subr.bf16.mxu0 0
        %724 = vmatpush1.bf16.msra.mxu0 0
        %725 = vmatprep.subr.bf16.mxu0 0
        %726 = vmatpush1.bf16.msra.mxu0 0
        %727 = vmatprep.subr.bf16.mxu0 0
        %728 = vmatpush1.bf16.msra.mxu0 0
        %729 = vmatprep.subr.bf16.mxu0 0
        %730 = vmatpush1.bf16.msra.mxu0 0
        %731 = vmatprep.subr.bf16.mxu0 0
        %732 = vmatpush1.bf16.msra.mxu0 0
        %733 = vmatprep.subr.bf16.mxu0 0
        %734 = vmatpush1.bf16.msra.mxu0 0
        %735 = vmatprep.subr.bf16.mxu0 0
        %736 = vmatpush1.bf16.msra.mxu0 0
        %737 = vmatprep.subr.bf16.mxu0 0
        %738 = vmatpush1.bf16.msra.mxu0 0
        %739 = vmatprep.mubr.bf16.mxu0 0
        %740 = vmatmul.mubr.bf16.gmra.mrb[0].mxu0 %v618
        %v741 = vpop.f32.mrb[0].mxu0
        %v742 = vadd.f32 %v657, %v741
        %v743 = vpop.f32.mrb[0].mxu0
        %v744 = vpop.f32.mrb[0].mxu0
        %v745 = vadd.f32 %v657, %v744
        %v746 = vpop.f32.mrb[0].mxu0
        %747 = vmatprep.mubr.bf16.mxu0 0
        %748 = vmatmul.mubr.bf16.gmra.mrb[0].mxu0 %v619
        %v749 = vpop.f32.mrb[0].mxu0
        %v750 = vadd.f32 %v657, %v749
        %v751 = vpop.f32.mrb[0].mxu0
        %v752 = vpop.f32.mrb[0].mxu0
        %v753 = vadd.f32 %v657, %v752
        %v754 = vpop.f32.mrb[0].mxu0
        %755 = vmatprep.mubr.bf16.mxu0 0
        %756 = vmatmul.mubr.bf16.gmra.mrb[0].mxu0 %v620
        %v757 = vpop.f32.mrb[0].mxu0
        %v758 = vadd.f32 %v657, %v757
        %v759 = vpop.f32.mrb[0].mxu0
        %v760 = vpop.f32.mrb[0].mxu0
        %v761 = vadd.f32 %v657, %v760
        %v762 = vpop.f32.mrb[0].mxu0
        %763 = vmatprep.mubr.bf16.mxu0 0
        %764 = vmatmul.mubr.bf16.gmra.mrb[0].mxu0 %v621
        %v765 = vpop.f32.mrb[0].mxu0
        %v766 = vadd.f32 %v657, %v765
        %v767 = vpop.f32.mrb[0].mxu0
        %v768 = vpop.f32.mrb[0].mxu0
        %v769 = vadd.f32 %v657, %v768
        %v770 = vpop.f32.mrb[0].mxu0
        %771 = vmatprep.mubr.bf16.mxu0 0
        %772 = vmatmul.mubr.bf16.gmra.mrb[0].mxu0 %v622
        %v773 = vpop.f32.mrb[0].mxu0
        %v774 = vadd.f32 %v657, %v773
        %v775 = vpop.f32.mrb[0].mxu0
        %v776 = vpop.f32.mrb[0].mxu0
        %v777 = vadd.f32 %v657, %v776
        %v778 = vpop.f32.mrb[0].mxu0
        %779 = vmatprep.mubr.bf16.mxu0 0
        %780 = vmatmul.mubr.bf16.gmra.mrb[0].mxu0 %v623
        %v781 = vpop.f32.mrb[0].mxu0
        %v782 = vadd.f32 %v657, %v781
        %v783 = vpop.f32.mrb[0].mxu0
        %v784 = vpop.f32.mrb[0].mxu0
        %v785 = vadd.f32 %v657, %v784
        %v786 = vpop.f32.mrb[0].mxu0
        %787 = vmatprep.mubr.bf16.mxu0 0
        %788 = vmatmul.mubr.bf16.gmra.mrb[0].mxu0 %v624
        %v789 = vpop.f32.mrb[0].mxu0
        %v790 = vadd.f32 %v657, %v789
        %v791 = vpop.f32.mrb[0].mxu0
        %v792 = vpop.f32.mrb[0].mxu0
        %v793 = vadd.f32 %v657, %v792
        %v794 = vpop.f32.mrb[0].mxu0
        %795 = vmatprep.mubr.bf16.mxu0 0
        %796 = vmatmul.mubr.bf16.gmra.mrb[0].mxu0 %v625
        %v797 = vpop.f32.mrb[0].mxu0
        %v798 = vadd.f32 %v657, %v797
        %v799 = vpop.f32.mrb[0].mxu0
        %v800 = vpop.f32.mrb[0].mxu0
        %v801 = vadd.f32 %v657, %v800
        %v802 = vpop.f32.mrb[0].mxu0
        %803 = vmatprep.mubr.bf16.mxu0 0
        %804 = vmatmul.mubr.bf16.gmra.mrb[0].mxu0 %v626
        %v805 = vpop.f32.mrb[0].mxu0
        %v806 = vadd.f32 %v657, %v805
        %v807 = vpop.f32.mrb[0].mxu0
        %v808 = vpop.f32.mrb[0].mxu0
        %v809 = vadd.f32 %v657, %v808
        %v810 = vpop.f32.mrb[0].mxu0
        %811 = vmatprep.mubr.bf16.mxu0 0
        %812 = vmatmul.mubr.bf16.gmra.mrb[0].mxu0 %v627
        %v813 = vpop.f32.mrb[0].mxu0
        %v814 = vadd.f32 %v657, %v813
        %v815 = vpop.f32.mrb[0].mxu0
        %v816 = vpop.f32.mrb[0].mxu0
        %v817 = vadd.f32 %v657, %v816
        %v818 = vpop.f32.mrb[0].mxu0
        %819 = vmatprep.mubr.bf16.mxu0 0
        %820 = vmatmul.mubr.bf16.gmra.mrb[0].mxu0 %v628
        %v821 = vpop.f32.mrb[0].mxu0
        %v822 = vadd.f32 %v657, %v821
        %v823 = vpop.f32.mrb[0].mxu0
        %v824 = vpop.f32.mrb[0].mxu0
        %v825 = vadd.f32 %v657, %v824
        %v826 = vpop.f32.mrb[0].mxu0
        %827 = vmatprep.mubr.bf16.mxu0 0
        %828 = vmatmul.mubr.bf16.gmra.mrb[0].mxu0 %v629
        %v829 = vpop.f32.mrb[0].mxu0
        %v830 = vadd.f32 %v657, %v829
        %v831 = vpop.f32.mrb[0].mxu0
        %v832 = vpop.f32.mrb[0].mxu0
        %v833 = vadd.f32 %v657, %v832
        %v834 = vpop.f32.mrb[0].mxu0
        %835 = vmatprep.mubr.bf16.mxu0 0
        %836 = vmatmul.mubr.bf16.gmra.mrb[0].mxu0 %v630
        %v837 = vpop.f32.mrb[0].mxu0
        %v838 = vadd.f32 %v657, %v837
        %v839 = vpop.f32.mrb[0].mxu0
        %v840 = vpop.f32.mrb[0].mxu0
        %v841 = vadd.f32 %v657, %v840
        %v842 = vpop.f32.mrb[0].mxu0
        %843 = vmatprep.mubr.bf16.mxu0 0
        %844 = vmatmul.mubr.bf16.gmra.mrb[0].mxu0 %v631
        %v845 = vpop.f32.mrb[0].mxu0
        %v846 = vadd.f32 %v657, %v845
        %v847 = vpop.f32.mrb[0].mxu0
        %v848 = vpop.f32.mrb[0].mxu0
        %v849 = vadd.f32 %v657, %v848
        %v850 = vpop.f32.mrb[0].mxu0
        %851 = vmatprep.mubr.bf16.mxu0 0
        %852 = vmatmul.mubr.bf16.gmra.mrb[0].mxu0 %v632
        %v853 = vpop.f32.mrb[0].mxu0
        %v854 = vadd.f32 %v657, %v853
        %v855 = vpop.f32.mrb[0].mxu0
        %v856 = vpop.f32.mrb[0].mxu0
        %v857 = vadd.f32 %v657, %v856
        %v858 = vpop.f32.mrb[0].mxu0
        %859 = vmatprep.mubr.bf16.mxu0 0
        %860 = vmatmul.mubr.bf16.gmra.mrb[0].mxu0 %v633
        %v861 = vpop.f32.mrb[0].mxu0
        %v862 = vadd.f32 %v657, %v861
        %v863 = vpop.f32.mrb[0].mxu0
        %v864 = vpop.f32.mrb[0].mxu0
        %v865 = vadd.f32 %v657, %v864
        %v866 = vpop.f32.mrb[0].mxu0
        %867 = vdwg.mxu0
        %v868 = vmax.f32 %v742, 0.0
        %v869 = vmax.f32 %v745, 0.0
        %v870 = vmax.f32 %v750, 0.0
        %v871 = vmax.f32 %v753, 0.0
        %v872 = vmax.f32 %v758, 0.0
        %v873 = vmax.f32 %v761, 0.0
        %v874 = vmax.f32 %v766, 0.0
        %v875 = vmax.f32 %v769, 0.0
        %v876 = vmax.f32 %v774, 0.0
        %v877 = vmax.f32 %v777, 0.0
        %v878 = vmax.f32 %v782, 0.0
        %v879 = vmax.f32 %v785, 0.0
        %v880 = vmax.f32 %v790, 0.0
        %v881 = vmax.f32 %v793, 0.0
        %v882 = vmax.f32 %v798, 0.0
        %v883 = vmax.f32 %v801, 0.0
        %v884 = vmax.f32 %v806, 0.0
        %v885 = vmax.f32 %v809, 0.0
        %v886 = vmax.f32 %v814, 0.0
        %v887 = vmax.f32 %v817, 0.0
        %v888 = vmax.f32 %v822, 0.0
        %v889 = vmax.f32 %v825, 0.0
        %v890 = vmax.f32 %v830, 0.0
        %v891 = vmax.f32 %v833, 0.0
        %v892 = vmax.f32 %v838, 0.0
        %v893 = vmax.f32 %v841, 0.0
        %v894 = vmax.f32 %v846, 0.0
        %v895 = vmax.f32 %v849, 0.0
        %v896 = vmax.f32 %v854, 0.0
        %v897 = vmax.f32 %v857, 0.0
        %v898 = vmax.f32 %v862, 0.0
        %v899 = vmax.f32 %v865, 0.0
        %v900 = vpack.c.bf16 %v869, %v868
        %v901 = vpack.c.bf16 %v871, %v870
        %v902 = vpack.c.bf16 %v873, %v872
        %v903 = vpack.c.bf16 %v875, %v874
        %v904 = vpack.c.bf16 %v877, %v876
        %v905 = vpack.c.bf16 %v879, %v878
        %v906 = vpack.c.bf16 %v881, %v880
        %v907 = vpack.c.bf16 %v883, %v882
        %v908 = vpack.c.bf16 %v885, %v884
        %v909 = vpack.c.bf16 %v887, %v886
        %v910 = vpack.c.bf16 %v889, %v888
        %v911 = vpack.c.bf16 %v891, %v890
        %v912 = vpack.c.bf16 %v893, %v892
        %v913 = vpack.c.bf16 %v895, %v894
        %v914 = vpack.c.bf16 %v897, %v896
        %v915 = vpack.c.bf16 %v899, %v898
        %s916 = scalar_lea.vmem [#allocation7], 128
        %v917 = vld [vmem:[%s916] sm:$0xf]
        %v918 = vld [vmem:[%s916 + $0x4] sm:$0xf]
        %v919 = vld [vmem:[%s916 + $0x8] sm:$0xf]
        %v920 = vld [vmem:[%s916 + $0xc] sm:$0xf]
        %v921 = vld [vmem:[%s916 + $0x10] sm:$0xf]
        %v922 = vld [vmem:[%s916 + $0x14] sm:$0xf]
        %v923 = vld [vmem:[%s916 + $0x18] sm:$0xf]
        %v924 = vld [vmem:[%s916 + $0x1c] sm:$0xf]
        %v925 = vld [vmem:[%s916 + $0x20] sm:$0xf]
        %v926 = vld [vmem:[%s916 + $0x24] sm:$0xf]
        %v927 = vld [vmem:[%s916 + $0x28] sm:$0xf]
        %v928 = vld [vmem:[%s916 + $0x2c] sm:$0xf]
        %v929 = vld [vmem:[%s916 + $0x30] sm:$0xf]
        %v930 = vld [vmem:[%s916 + $0x34] sm:$0xf]
        %v931 = vld [vmem:[%s916 + $0x38] sm:$0xf]
        %v932 = vld [vmem:[%s916 + $0x3c] sm:$0xf]
        %s933 = scalar_lea.vmem %s3, 2
        %v934 = vld [vmem:[%s933] sm:$0x1]
        %v936 = vlaneseq
        %v937 = vshrl.u32 %v936, 7
        %v938 = vsub.s32 0, %v937
        %v939 = vrot.slane %v934, %v938
        %v957 = vunpack.c.l.b16 %v917
        %v958 = vunpack.c.l.b16 %v918
        %v959 = vunpack.c.l.b16 %v919
        %v960 = vunpack.c.l.b16 %v920
        %v961 = vunpack.c.l.b16 %v921
        %v962 = vunpack.c.l.b16 %v922
        %v963 = vunpack.c.l.b16 %v923
        %v964 = vunpack.c.l.b16 %v924
        %v965 = vunpack.c.l.b16 %v925
        %v966 = vunpack.c.l.b16 %v926
        %v967 = vunpack.c.l.b16 %v927
        %v968 = vunpack.c.l.b16 %v928
        %v969 = vunpack.c.l.b16 %v929
        %v970 = vunpack.c.l.b16 %v930
        %v971 = vunpack.c.l.b16 %v931
        %v972 = vunpack.c.l.b16 %v932
        %v973 = vpack.c.b16 %v958, %v957
        %v974 = vpack.c.b16 %v960, %v959
        %v975 = vpack.c.b16 %v962, %v961
        %v976 = vpack.c.b16 %v964, %v963
        %v977 = vpack.c.b16 %v966, %v965
        %v978 = vpack.c.b16 %v968, %v967
        %v979 = vpack.c.b16 %v970, %v969
        %v980 = vpack.c.b16 %v972, %v971
        %989 = vmatprep.subr.bf16.mxu0 0
        %990 = vmatpush1.bf16.msra.mxu0 %v973
        %991 = vmatprep.subr.bf16.mxu0 0
        %992 = vmatpush1.bf16.msra.mxu0 %v974
        %993 = vmatprep.subr.bf16.mxu0 0
        %994 = vmatpush1.bf16.msra.mxu0 %v975
        %995 = vmatprep.subr.bf16.mxu0 0
        %996 = vmatpush1.bf16.msra.mxu0 %v976
        %997 = vmatprep.subr.bf16.mxu0 0
        %998 = vmatpush1.bf16.msra.mxu0 %v977
        %999 = vmatprep.subr.bf16.mxu0 0
        %1000 = vmatpush1.bf16.msra.mxu0 %v978
        %1001 = vmatprep.subr.bf16.mxu0 0
        %1002 = vmatpush1.bf16.msra.mxu0 %v979
        %1003 = vmatprep.subr.bf16.mxu0 0
        %1004 = vmatpush1.bf16.msra.mxu0 %v980
        %1005 = vmatprep.subr.bf16.mxu0 0
        %1006 = vmatpush1.bf16.msra.mxu0 0
        %1007 = vmatprep.subr.bf16.mxu0 0
        %1008 = vmatpush1.bf16.msra.mxu0 0
        %1009 = vmatprep.subr.bf16.mxu0 0
        %1010 = vmatpush1.bf16.msra.mxu0 0
        %1011 = vmatprep.subr.bf16.mxu0 0
        %1012 = vmatpush1.bf16.msra.mxu0 0
        %1013 = vmatprep.subr.bf16.mxu0 0
        %1014 = vmatpush1.bf16.msra.mxu0 0
        %1015 = vmatprep.subr.bf16.mxu0 0
        %1016 = vmatpush1.bf16.msra.mxu0 0
        %1017 = vmatprep.subr.bf16.mxu0 0
        %1018 = vmatpush1.bf16.msra.mxu0 0
        %1019 = vmatprep.subr.bf16.mxu0 0
        %1020 = vmatpush1.bf16.msra.mxu0 0
        %1021 = vmatprep.mubr.bf16.mxu0 0
        %1022 = vmatmul.mubr.bf16.gmra.mrb[0].mxu0 %v900
        %v1023 = vpop.f32.mrb[0].mxu0
        %v1024 = vadd.f32 %v939, %v1023
        %v1025 = vpop.f32.mrb[0].mxu0
        %v1026 = vpop.f32.mrb[0].mxu0
        %v1027 = vadd.f32 %v939, %v1026
        %v1028 = vpop.f32.mrb[0].mxu0
        %1029 = vmatprep.mubr.bf16.mxu0 0
        %1030 = vmatmul.mubr.bf16.gmra.mrb[0].mxu0 %v901
        %v1031 = vpop.f32.mrb[0].mxu0
        %v1032 = vadd.f32 %v939, %v1031
        %v1033 = vpop.f32.mrb[0].mxu0
        %v1034 = vpop.f32.mrb[0].mxu0
        %v1035 = vadd.f32 %v939, %v1034
        %v1036 = vpop.f32.mrb[0].mxu0
        %1037 = vmatprep.mubr.bf16.mxu0 0
        %1038 = vmatmul.mubr.bf16.gmra.mrb[0].mxu0 %v902
        %v1039 = vpop.f32.mrb[0].mxu0
        %v1040 = vadd.f32 %v939, %v1039
        %v1041 = vpop.f32.mrb[0].mxu0
        %v1042 = vpop.f32.mrb[0].mxu0
        %v1043 = vadd.f32 %v939, %v1042
        %v1044 = vpop.f32.mrb[0].mxu0
        %1045 = vmatprep.mubr.bf16.mxu0 0
        %1046 = vmatmul.mubr.bf16.gmra.mrb[0].mxu0 %v903
        %v1047 = vpop.f32.mrb[0].mxu0
        %v1048 = vadd.f32 %v939, %v1047
        %v1049 = vpop.f32.mrb[0].mxu0
        %v1050 = vpop.f32.mrb[0].mxu0
        %v1051 = vadd.f32 %v939, %v1050
        %v1052 = vpop.f32.mrb[0].mxu0
        %1053 = vmatprep.mubr.bf16.mxu0 0
        %1054 = vmatmul.mubr.bf16.gmra.mrb[0].mxu0 %v904
        %v1055 = vpop.f32.mrb[0].mxu0
        %v1056 = vadd.f32 %v939, %v1055
        %v1057 = vpop.f32.mrb[0].mxu0
        %v1058 = vpop.f32.mrb[0].mxu0
        %v1059 = vadd.f32 %v939, %v1058
        %v1060 = vpop.f32.mrb[0].mxu0
        %1061 = vmatprep.mubr.bf16.mxu0 0
        %1062 = vmatmul.mubr.bf16.gmra.mrb[0].mxu0 %v905
        %v1063 = vpop.f32.mrb[0].mxu0
        %v1064 = vadd.f32 %v939, %v1063
        %v1065 = vpop.f32.mrb[0].mxu0
        %v1066 = vpop.f32.mrb[0].mxu0
        %v1067 = vadd.f32 %v939, %v1066
        %v1068 = vpop.f32.mrb[0].mxu0
        %1069 = vmatprep.mubr.bf16.mxu0 0
        %1070 = vmatmul.mubr.bf16.gmra.mrb[0].mxu0 %v906
        %v1071 = vpop.f32.mrb[0].mxu0
        %v1072 = vadd.f32 %v939, %v1071
        %v1073 = vpop.f32.mrb[0].mxu0
        %v1074 = vpop.f32.mrb[0].mxu0
        %v1075 = vadd.f32 %v939, %v1074
        %v1076 = vpop.f32.mrb[0].mxu0
        %1077 = vmatprep.mubr.bf16.mxu0 0
        %1078 = vmatmul.mubr.bf16.gmra.mrb[0].mxu0 %v907
        %v1079 = vpop.f32.mrb[0].mxu0
        %v1080 = vadd.f32 %v939, %v1079
        %v1081 = vpop.f32.mrb[0].mxu0
        %v1082 = vpop.f32.mrb[0].mxu0
        %v1083 = vadd.f32 %v939, %v1082
        %v1084 = vpop.f32.mrb[0].mxu0
        %1085 = vmatprep.mubr.bf16.mxu0 0
        %1086 = vmatmul.mubr.bf16.gmra.mrb[0].mxu0 %v908
        %v1087 = vpop.f32.mrb[0].mxu0
        %v1088 = vadd.f32 %v939, %v1087
        %v1089 = vpop.f32.mrb[0].mxu0
        %v1090 = vpop.f32.mrb[0].mxu0
        %v1091 = vadd.f32 %v939, %v1090
        %v1092 = vpop.f32.mrb[0].mxu0
        %1093 = vmatprep.mubr.bf16.mxu0 0
        %1094 = vmatmul.mubr.bf16.gmra.mrb[0].mxu0 %v909
        %v1095 = vpop.f32.mrb[0].mxu0
        %v1096 = vadd.f32 %v939, %v1095
        %v1097 = vpop.f32.mrb[0].mxu0
        %v1098 = vpop.f32.mrb[0].mxu0
        %v1099 = vadd.f32 %v939, %v1098
        %v1100 = vpop.f32.mrb[0].mxu0
        %1101 = vmatprep.mubr.bf16.mxu0 0
        %1102 = vmatmul.mubr.bf16.gmra.mrb[0].mxu0 %v910
        %v1103 = vpop.f32.mrb[0].mxu0
        %v1104 = vadd.f32 %v939, %v1103
        %v1105 = vpop.f32.mrb[0].mxu0
        %v1106 = vpop.f32.mrb[0].mxu0
        %v1107 = vadd.f32 %v939, %v1106
        %v1108 = vpop.f32.mrb[0].mxu0
        %1109 = vmatprep.mubr.bf16.mxu0 0
        %1110 = vmatmul.mubr.bf16.gmra.mrb[0].mxu0 %v911
        %v1111 = vpop.f32.mrb[0].mxu0
        %v1112 = vadd.f32 %v939, %v1111
        %v1113 = vpop.f32.mrb[0].mxu0
        %v1114 = vpop.f32.mrb[0].mxu0
        %v1115 = vadd.f32 %v939, %v1114
        %v1116 = vpop.f32.mrb[0].mxu0
        %1117 = vmatprep.mubr.bf16.mxu0 0
        %1118 = vmatmul.mubr.bf16.gmra.mrb[0].mxu0 %v912
        %v1119 = vpop.f32.mrb[0].mxu0
        %v1120 = vadd.f32 %v939, %v1119
        %v1121 = vpop.f32.mrb[0].mxu0
        %v1122 = vpop.f32.mrb[0].mxu0
        %v1123 = vadd.f32 %v939, %v1122
        %v1124 = vpop.f32.mrb[0].mxu0
        %1125 = vmatprep.mubr.bf16.mxu0 0
        %1126 = vmatmul.mubr.bf16.gmra.mrb[0].mxu0 %v913
        %v1127 = vpop.f32.mrb[0].mxu0
        %v1128 = vadd.f32 %v939, %v1127
        %v1129 = vpop.f32.mrb[0].mxu0
        %v1130 = vpop.f32.mrb[0].mxu0
        %v1131 = vadd.f32 %v939, %v1130
        %v1132 = vpop.f32.mrb[0].mxu0
        %1133 = vmatprep.mubr.bf16.mxu0 0
        %1134 = vmatmul.mubr.bf16.gmra.mrb[0].mxu0 %v914
        %v1135 = vpop.f32.mrb[0].mxu0
        %v1136 = vadd.f32 %v939, %v1135
        %v1137 = vpop.f32.mrb[0].mxu0
        %v1138 = vpop.f32.mrb[0].mxu0
        %v1139 = vadd.f32 %v939, %v1138
        %v1140 = vpop.f32.mrb[0].mxu0
        %1141 = vmatprep.mubr.bf16.mxu0 0
        %1142 = vmatmul.mubr.bf16.gmra.mrb[0].mxu0 %v915
        %v1143 = vpop.f32.mrb[0].mxu0
        %v1144 = vadd.f32 %v939, %v1143
        %v1145 = vpop.f32.mrb[0].mxu0
        %v1146 = vpop.f32.mrb[0].mxu0
        %v1147 = vadd.f32 %v939, %v1146
        %v1148 = vpop.f32.mrb[0].mxu0
        %1149 = vdwg.mxu0
        %s1150 = scalar_lea.vmem [#allocation7], 192
        %v1151 = vld [vmem:[%s1150] sm:$0xf]
        %v1152 = vld [vmem:[%s1150 + $0x4] sm:$0xf]
        %v1153 = vld [vmem:[%s1150 + $0x8] sm:$0xf]
        %v1154 = vld [vmem:[%s1150 + $0xc] sm:$0xf]
        %v1155 = vld [vmem:[%s1150 + $0x10] sm:$0xf]
        %v1156 = vld [vmem:[%s1150 + $0x14] sm:$0xf]
        %v1157 = vld [vmem:[%s1150 + $0x18] sm:$0xf]
        %v1158 = vld [vmem:[%s1150 + $0x1c] sm:$0xf]
        %v1159 = vld [vmem:[%s1150 + $0x20] sm:$0xf]
        %v1160 = vld [vmem:[%s1150 + $0x24] sm:$0xf]
        %v1161 = vld [vmem:[%s1150 + $0x28] sm:$0xf]
        %v1162 = vld [vmem:[%s1150 + $0x2c] sm:$0xf]
        %v1163 = vld [vmem:[%s1150 + $0x30] sm:$0xf]
        %v1164 = vld [vmem:[%s1150 + $0x34] sm:$0xf]
        %v1165 = vld [vmem:[%s1150 + $0x38] sm:$0xf]
        %v1166 = vld [vmem:[%s1150 + $0x3c] sm:$0xf]
        %s1167 = scalar_lea.vmem %s3, 3
        %v1168 = vld [vmem:[%s1167] sm:$0x1]
        %v1170 = vlaneseq
        %v1171 = vshrl.u32 %v1170, 7
        %v1172 = vsub.s32 0, %v1171
        %v1173 = vrot.slane %v1168, %v1172
        %v1191 = vunpack.c.l.b16 %v1151
        %v1192 = vunpack.c.l.b16 %v1152
        %v1193 = vunpack.c.l.b16 %v1153
        %v1194 = vunpack.c.l.b16 %v1154
        %v1195 = vunpack.c.l.b16 %v1155
        %v1196 = vunpack.c.l.b16 %v1156
        %v1197 = vunpack.c.l.b16 %v1157
        %v1198 = vunpack.c.l.b16 %v1158
        %v1199 = vunpack.c.l.b16 %v1159
        %v1200 = vunpack.c.l.b16 %v1160
        %v1201 = vunpack.c.l.b16 %v1161
        %v1202 = vunpack.c.l.b16 %v1162
        %v1203 = vunpack.c.l.b16 %v1163
        %v1204 = vunpack.c.l.b16 %v1164
        %v1205 = vunpack.c.l.b16 %v1165
        %v1206 = vunpack.c.l.b16 %v1166
        %v1207 = vpack.c.b16 %v1192, %v1191
        %v1208 = vpack.c.b16 %v1194, %v1193
        %v1209 = vpack.c.b16 %v1196, %v1195
        %v1210 = vpack.c.b16 %v1198, %v1197
        %v1211 = vpack.c.b16 %v1200, %v1199
        %v1212 = vpack.c.b16 %v1202, %v1201
        %v1213 = vpack.c.b16 %v1204, %v1203
        %v1214 = vpack.c.b16 %v1206, %v1205
        %1223 = vmatprep.subr.bf16.mxu0 0
        %1224 = vmatpush1.bf16.msra.mxu0 %v1207
        %1225 = vmatprep.subr.bf16.mxu0 0
        %1226 = vmatpush1.bf16.msra.mxu0 %v1208
        %1227 = vmatprep.subr.bf16.mxu0 0
        %1228 = vmatpush1.bf16.msra.mxu0 %v1209
        %1229 = vmatprep.subr.bf16.mxu0 0
        %1230 = vmatpush1.bf16.msra.mxu0 %v1210
        %1231 = vmatprep.subr.bf16.mxu0 0
        %1232 = vmatpush1.bf16.msra.mxu0 %v1211
        %1233 = vmatprep.subr.bf16.mxu0 0
        %1234 = vmatpush1.bf16.msra.mxu0 %v1212
        %1235 = vmatprep.subr.bf16.mxu0 0
        %1236 = vmatpush1.bf16.msra.mxu0 %v1213
        %1237 = vmatprep.subr.bf16.mxu0 0
        %1238 = vmatpush1.bf16.msra.mxu0 %v1214
        %1239 = vmatprep.subr.bf16.mxu0 0
        %1240 = vmatpush1.bf16.msra.mxu0 0
        %1241 = vmatprep.subr.bf16.mxu0 0
        %1242 = vmatpush1.bf16.msra.mxu0 0
        %1243 = vmatprep.subr.bf16.mxu0 0
        %1244 = vmatpush1.bf16.msra.mxu0 0
        %1245 = vmatprep.subr.bf16.mxu0 0
        %1246 = vmatpush1.bf16.msra.mxu0 0
        %1247 = vmatprep.subr.bf16.mxu0 0
        %1248 = vmatpush1.bf16.msra.mxu0 0
        %1249 = vmatprep.subr.bf16.mxu0 0
        %1250 = vmatpush1.bf16.msra.mxu0 0
        %1251 = vmatprep.subr.bf16.mxu0 0
        %1252 = vmatpush1.bf16.msra.mxu0 0
        %1253 = vmatprep.subr.bf16.mxu0 0
        %1254 = vmatpush1.bf16.msra.mxu0 0
        %1255 = vmatprep.mubr.bf16.mxu0 0
        %1256 = vmatmul.mubr.bf16.gmra.mrb[0].mxu0 %v900
        %v1257 = vpop.f32.mrb[0].mxu0
        %v1258 = vadd.f32 %v1173, %v1257
        %v1259 = vpop.f32.mrb[0].mxu0
        %v1260 = vpop.f32.mrb[0].mxu0
        %v1261 = vadd.f32 %v1173, %v1260
        %v1262 = vpop.f32.mrb[0].mxu0
        %1263 = vmatprep.mubr.bf16.mxu0 0
        %1264 = vmatmul.mubr.bf16.gmra.mrb[0].mxu0 %v901
        %v1265 = vpop.f32.mrb[0].mxu0
        %v1266 = vadd.f32 %v1173, %v1265
        %v1267 = vpop.f32.mrb[0].mxu0
        %v1268 = vpop.f32.mrb[0].mxu0
        %v1269 = vadd.f32 %v1173, %v1268
        %v1270 = vpop.f32.mrb[0].mxu0
        %1271 = vmatprep.mubr.bf16.mxu0 0
        %1272 = vmatmul.mubr.bf16.gmra.mrb[0].mxu0 %v902
        %v1273 = vpop.f32.mrb[0].mxu0
        %v1274 = vadd.f32 %v1173, %v1273
        %v1275 = vpop.f32.mrb[0].mxu0
        %v1276 = vpop.f32.mrb[0].mxu0
        %v1277 = vadd.f32 %v1173, %v1276
        %v1278 = vpop.f32.mrb[0].mxu0
        %1279 = vmatprep.mubr.bf16.mxu0 0
        %1280 = vmatmul.mubr.bf16.gmra.mrb[0].mxu0 %v903
        %v1281 = vpop.f32.mrb[0].mxu0
        %v1282 = vadd.f32 %v1173, %v1281
        %v1283 = vpop.f32.mrb[0].mxu0
        %v1284 = vpop.f32.mrb[0].mxu0
        %v1285 = vadd.f32 %v1173, %v1284
        %v1286 = vpop.f32.mrb[0].mxu0
        %1287 = vmatprep.mubr.bf16.mxu0 0
        %1288 = vmatmul.mubr.bf16.gmra.mrb[0].mxu0 %v904
        %v1289 = vpop.f32.mrb[0].mxu0
        %v1290 = vadd.f32 %v1173, %v1289
        %v1291 = vpop.f32.mrb[0].mxu0
        %v1292 = vpop.f32.mrb[0].mxu0
        %v1293 = vadd.f32 %v1173, %v1292
        %v1294 = vpop.f32.mrb[0].mxu0
        %1295 = vmatprep.mubr.bf16.mxu0 0
        %1296 = vmatmul.mubr.bf16.gmra.mrb[0].mxu0 %v905
        %v1297 = vpop.f32.mrb[0].mxu0
        %v1298 = vadd.f32 %v1173, %v1297
        %v1299 = vpop.f32.mrb[0].mxu0
        %v1300 = vpop.f32.mrb[0].mxu0
        %v1301 = vadd.f32 %v1173, %v1300
        %v1302 = vpop.f32.mrb[0].mxu0
        %1303 = vmatprep.mubr.bf16.mxu0 0
        %1304 = vmatmul.mubr.bf16.gmra.mrb[0].mxu0 %v906
        %v1305 = vpop.f32.mrb[0].mxu0
        %v1306 = vadd.f32 %v1173, %v1305
        %v1307 = vpop.f32.mrb[0].mxu0
        %v1308 = vpop.f32.mrb[0].mxu0
        %v1309 = vadd.f32 %v1173, %v1308
        %v1310 = vpop.f32.mrb[0].mxu0
        %1311 = vmatprep.mubr.bf16.mxu0 0
        %1312 = vmatmul.mubr.bf16.gmra.mrb[0].mxu0 %v907
        %v1313 = vpop.f32.mrb[0].mxu0
        %v1314 = vadd.f32 %v1173, %v1313
        %v1315 = vpop.f32.mrb[0].mxu0
        %v1316 = vpop.f32.mrb[0].mxu0
        %v1317 = vadd.f32 %v1173, %v1316
        %v1318 = vpop.f32.mrb[0].mxu0
        %1319 = vmatprep.mubr.bf16.mxu0 0
        %1320 = vmatmul.mubr.bf16.gmra.mrb[0].mxu0 %v908
        %v1321 = vpop.f32.mrb[0].mxu0
        %v1322 = vadd.f32 %v1173, %v1321
        %v1323 = vpop.f32.mrb[0].mxu0
        %v1324 = vpop.f32.mrb[0].mxu0
        %v1325 = vadd.f32 %v1173, %v1324
        %v1326 = vpop.f32.mrb[0].mxu0
        %1327 = vmatprep.mubr.bf16.mxu0 0
        %1328 = vmatmul.mubr.bf16.gmra.mrb[0].mxu0 %v909
        %v1329 = vpop.f32.mrb[0].mxu0
        %v1330 = vadd.f32 %v1173, %v1329
        %v1331 = vpop.f32.mrb[0].mxu0
        %v1332 = vpop.f32.mrb[0].mxu0
        %v1333 = vadd.f32 %v1173, %v1332
        %v1334 = vpop.f32.mrb[0].mxu0
        %1335 = vmatprep.mubr.bf16.mxu0 0
        %1336 = vmatmul.mubr.bf16.gmra.mrb[0].mxu0 %v910
        %v1337 = vpop.f32.mrb[0].mxu0
        %v1338 = vadd.f32 %v1173, %v1337
        %v1339 = vpop.f32.mrb[0].mxu0
        %v1340 = vpop.f32.mrb[0].mxu0
        %v1341 = vadd.f32 %v1173, %v1340
        %v1342 = vpop.f32.mrb[0].mxu0
        %1343 = vmatprep.mubr.bf16.mxu0 0
        %1344 = vmatmul.mubr.bf16.gmra.mrb[0].mxu0 %v911
        %v1345 = vpop.f32.mrb[0].mxu0
        %v1346 = vadd.f32 %v1173, %v1345
        %v1347 = vpop.f32.mrb[0].mxu0
        %v1348 = vpop.f32.mrb[0].mxu0
        %v1349 = vadd.f32 %v1173, %v1348
        %v1350 = vpop.f32.mrb[0].mxu0
        %1351 = vmatprep.mubr.bf16.mxu0 0
        %1352 = vmatmul.mubr.bf16.gmra.mrb[0].mxu0 %v912
        %v1353 = vpop.f32.mrb[0].mxu0
        %v1354 = vadd.f32 %v1173, %v1353
        %v1355 = vpop.f32.mrb[0].mxu0
        %v1356 = vpop.f32.mrb[0].mxu0
        %v1357 = vadd.f32 %v1173, %v1356
        %v1358 = vpop.f32.mrb[0].mxu0
        %1359 = vmatprep.mubr.bf16.mxu0 0
        %1360 = vmatmul.mubr.bf16.gmra.mrb[0].mxu0 %v913
        %v1361 = vpop.f32.mrb[0].mxu0
        %v1362 = vadd.f32 %v1173, %v1361
        %v1363 = vpop.f32.mrb[0].mxu0
        %v1364 = vpop.f32.mrb[0].mxu0
        %v1365 = vadd.f32 %v1173, %v1364
        %v1366 = vpop.f32.mrb[0].mxu0
        %1367 = vmatprep.mubr.bf16.mxu0 0
        %1368 = vmatmul.mubr.bf16.gmra.mrb[0].mxu0 %v914
        %v1369 = vpop.f32.mrb[0].mxu0
        %v1370 = vadd.f32 %v1173, %v1369
        %v1371 = vpop.f32.mrb[0].mxu0
        %v1372 = vpop.f32.mrb[0].mxu0
        %v1373 = vadd.f32 %v1173, %v1372
        %v1374 = vpop.f32.mrb[0].mxu0
        %1375 = vmatprep.mubr.bf16.mxu0 0
        %1376 = vmatmul.mubr.bf16.gmra.mrb[0].mxu0 %v915
        %v1377 = vpop.f32.mrb[0].mxu0
        %v1378 = vadd.f32 %v1173, %v1377
        %v1379 = vpop.f32.mrb[0].mxu0
        %v1380 = vpop.f32.mrb[0].mxu0
        %v1381 = vadd.f32 %v1173, %v1380
        %v1382 = vpop.f32.mrb[0].mxu0
        %1383 = vdwg.mxu0
        %v1384 = vmul.f32 %v1258, 0.5
        %v1385 = vmul.f32 %v1261, 0.5
        %v1386 = vmul.f32 %v1266, 0.5
        %v1387 = vmul.f32 %v1269, 0.5
        %v1388 = vmul.f32 %v1274, 0.5
        %v1389 = vmul.f32 %v1277, 0.5
        %v1390 = vmul.f32 %v1282, 0.5
        %v1391 = vmul.f32 %v1285, 0.5
        %v1392 = vmul.f32 %v1290, 0.5
        %v1393 = vmul.f32 %v1293, 0.5
        %v1394 = vmul.f32 %v1298, 0.5
        %v1395 = vmul.f32 %v1301, 0.5
        %v1396 = vmul.f32 %v1306, 0.5
        %v1397 = vmul.f32 %v1309, 0.5
        %v1398 = vmul.f32 %v1314, 0.5
        %v1399 = vmul.f32 %v1317, 0.5
        %v1400 = vmul.f32 %v1322, 0.5
        %v1401 = vmul.f32 %v1325, 0.5
        %v1402 = vmul.f32 %v1330, 0.5
        %v1403 = vmul.f32 %v1333, 0.5
        %v1404 = vmul.f32 %v1338, 0.5
        %v1405 = vmul.f32 %v1341, 0.5
        %v1406 = vmul.f32 %v1346, 0.5
        %v1407 = vmul.f32 %v1349, 0.5
        %v1408 = vmul.f32 %v1354, 0.5
        %v1409 = vmul.f32 %v1357, 0.5
        %v1410 = vmul.f32 %v1362, 0.5
        %v1411 = vmul.f32 %v1365, 0.5
        %v1412 = vmul.f32 %v1370, 0.5
        %v1413 = vmul.f32 %v1373, 0.5
        %v1414 = vmul.f32 %v1378, 0.5
        %v1415 = vmul.f32 %v1381, 0.5
        %v1416 = vmul.f32 %v1384, 1.442695
        %v1417 = vpow.pop %v1416
        %v1418 = vmul.f32 %v1385, 1.442695
        %v1419 = vpow.pop %v1418
        %v1420 = vmul.f32 %v1386, 1.442695
        %v1421 = vpow.pop %v1420
        %v1422 = vmul.f32 %v1387, 1.442695
        %v1423 = vpow.pop %v1422
        %v1424 = vmul.f32 %v1388, 1.442695
        %v1425 = vpow.pop %v1424
        %v1426 = vmul.f32 %v1389, 1.442695
        %v1427 = vpow.pop %v1426
        %v1428 = vmul.f32 %v1390, 1.442695
        %v1429 = vpow.pop %v1428
        %v1430 = vmul.f32 %v1391, 1.442695
        %v1431 = vpow.pop %v1430
        %v1432 = vmul.f32 %v1392, 1.442695
        %v1433 = vpow.pop %v1432
        %v1434 = vmul.f32 %v1393, 1.442695
        %v1435 = vpow.pop %v1434
        %v1436 = vmul.f32 %v1394, 1.442695
        %v1437 = vpow.pop %v1436
        %v1438 = vmul.f32 %v1395, 1.442695
        %v1439 = vpow.pop %v1438
        %v1440 = vmul.f32 %v1396, 1.442695
        %v1441 = vpow.pop %v1440
        %v1442 = vmul.f32 %v1397, 1.442695
        %v1443 = vpow.pop %v1442
        %v1444 = vmul.f32 %v1398, 1.442695
        %v1445 = vpow.pop %v1444
        %v1446 = vmul.f32 %v1399, 1.442695
        %v1447 = vpow.pop %v1446
        %v1448 = vmul.f32 %v1400, 1.442695
        %v1449 = vpow.pop %v1448
        %v1450 = vmul.f32 %v1401, 1.442695
        %v1451 = vpow.pop %v1450
        %v1452 = vmul.f32 %v1402, 1.442695
        %v1453 = vpow.pop %v1452
        %v1454 = vmul.f32 %v1403, 1.442695
        %v1455 = vpow.pop %v1454
        %v1456 = vmul.f32 %v1404, 1.442695
        %v1457 = vpow.pop %v1456
        %v1458 = vmul.f32 %v1405, 1.442695
        %v1459 = vpow.pop %v1458
        %v1460 = vmul.f32 %v1406, 1.442695
        %v1461 = vpow.pop %v1460
        %v1462 = vmul.f32 %v1407, 1.442695
        %v1463 = vpow.pop %v1462
        %v1464 = vmul.f32 %v1408, 1.442695
        %v1465 = vpow.pop %v1464
        %v1466 = vmul.f32 %v1409, 1.442695
        %v1467 = vpow.pop %v1466
        %v1468 = vmul.f32 %v1410, 1.442695
        %v1469 = vpow.pop %v1468
        %v1470 = vmul.f32 %v1411, 1.442695
        %v1471 = vpow.pop %v1470
        %v1472 = vmul.f32 %v1412, 1.442695
        %v1473 = vpow.pop %v1472
        %v1474 = vmul.f32 %v1413, 1.442695
        %v1475 = vpow.pop %v1474
        %v1476 = vmul.f32 %v1414, 1.442695
        %v1477 = vpow.pop %v1476
        %v1478 = vmul.f32 %v1415, 1.442695
        %v1479 = vpow.pop %v1478
        %v1480 = vmul.f32 %v306, %v1417
        %v1481 = vmul.f32 %v307, %v1419
        %v1482 = vmul.f32 %v308, %v1421
        %v1483 = vmul.f32 %v309, %v1423
        %v1484 = vmul.f32 %v310, %v1425
        %v1485 = vmul.f32 %v311, %v1427
        %v1486 = vmul.f32 %v312, %v1429
        %v1487 = vmul.f32 %v313, %v1431
        %v1488 = vmul.f32 %v314, %v1433
        %v1489 = vmul.f32 %v315, %v1435
        %v1490 = vmul.f32 %v316, %v1437
        %v1491 = vmul.f32 %v317, %v1439
        %v1492 = vmul.f32 %v318, %v1441
        %v1493 = vmul.f32 %v319, %v1443
        %v1494 = vmul.f32 %v320, %v1445
        %v1495 = vmul.f32 %v321, %v1447
        %v1496 = vmul.f32 %v322, %v1449
        %v1497 = vmul.f32 %v323, %v1451
        %v1498 = vmul.f32 %v324, %v1453
        %v1499 = vmul.f32 %v325, %v1455
        %v1500 = vmul.f32 %v326, %v1457
        %v1501 = vmul.f32 %v327, %v1459
        %v1502 = vmul.f32 %v328, %v1461
        %v1503 = vmul.f32 %v329, %v1463
        %v1504 = vmul.f32 %v330, %v1465
        %v1505 = vmul.f32 %v331, %v1467
        %v1506 = vmul.f32 %v332, %v1469
        %v1507 = vmul.f32 %v333, %v1471
        %v1508 = vmul.f32 %v334, %v1473
        %v1509 = vmul.f32 %v335, %v1475
        %v1510 = vmul.f32 %v336, %v1477
        %v1511 = vmul.f32 %v337, %v1479
        %v1512 = vadd.f32 %v1024, %v1480
        %v1513 = vadd.f32 %v1027, %v1481
        %v1514 = vadd.f32 %v1032, %v1482
        %v1515 = vadd.f32 %v1035, %v1483
        %v1516 = vadd.f32 %v1040, %v1484
        %v1517 = vadd.f32 %v1043, %v1485
        %v1518 = vadd.f32 %v1048, %v1486
        %v1519 = vadd.f32 %v1051, %v1487
        %v1520 = vadd.f32 %v1056, %v1488
        %v1521 = vadd.f32 %v1059, %v1489
        %v1522 = vadd.f32 %v1064, %v1490
        %v1523 = vadd.f32 %v1067, %v1491
        %v1524 = vadd.f32 %v1072, %v1492
        %v1525 = vadd.f32 %v1075, %v1493
        %v1526 = vadd.f32 %v1080, %v1494
        %v1527 = vadd.f32 %v1083, %v1495
        %v1528 = vadd.f32 %v1088, %v1496
        %v1529 = vadd.f32 %v1091, %v1497
        %v1530 = vadd.f32 %v1096, %v1498
        %v1531 = vadd.f32 %v1099, %v1499
        %v1532 = vadd.f32 %v1104, %v1500
        %v1533 = vadd.f32 %v1107, %v1501
        %v1534 = vadd.f32 %v1112, %v1502
        %v1535 = vadd.f32 %v1115, %v1503
        %v1536 = vadd.f32 %v1120, %v1504
        %v1537 = vadd.f32 %v1123, %v1505
        %v1538 = vadd.f32 %v1128, %v1506
        %v1539 = vadd.f32 %v1131, %v1507
        %v1540 = vadd.f32 %v1136, %v1508
        %v1541 = vadd.f32 %v1139, %v1509
        %v1542 = vadd.f32 %v1144, %v1510
        %v1543 = vadd.f32 %v1147, %v1511
        %v1544 = vpack.c.bf16 %v1513, %v1512
        %v1545 = vpack.c.bf16 %v1515, %v1514
        %v1546 = vpack.c.bf16 %v1517, %v1516
        %v1547 = vpack.c.bf16 %v1519, %v1518
        %v1548 = vpack.c.bf16 %v1521, %v1520
        %v1549 = vpack.c.bf16 %v1523, %v1522
        %v1550 = vpack.c.bf16 %v1525, %v1524
        %v1551 = vpack.c.bf16 %v1527, %v1526
        %v1552 = vpack.c.bf16 %v1529, %v1528
        %v1553 = vpack.c.bf16 %v1531, %v1530
        %v1554 = vpack.c.bf16 %v1533, %v1532
        %v1555 = vpack.c.bf16 %v1535, %v1534
        %v1556 = vpack.c.bf16 %v1537, %v1536
        %v1557 = vpack.c.bf16 %v1539, %v1538
        %v1558 = vpack.c.bf16 %v1541, %v1540
        %v1559 = vpack.c.bf16 %v1543, %v1542
        %s1560 = scalar_lea.vmem [#allocation7], 256
        %v1561 = vld [vmem:[%s1560] sm:$0xf]
        %v1562 = vld [vmem:[%s1560 + $0x4] sm:$0xf]
        %v1563 = vld [vmem:[%s1560 + $0x8] sm:$0xf]
        %v1564 = vld [vmem:[%s1560 + $0xc] sm:$0xf]
        %v1565 = vld [vmem:[%s1560 + $0x10] sm:$0xf]
        %v1566 = vld [vmem:[%s1560 + $0x14] sm:$0xf]
        %v1567 = vld [vmem:[%s1560 + $0x18] sm:$0xf]
        %v1568 = vld [vmem:[%s1560 + $0x1c] sm:$0xf]
        %v1569 = vld [vmem:[%s1560 + $0x20] sm:$0xf]
        %v1570 = vld [vmem:[%s1560 + $0x24] sm:$0xf]
        %v1571 = vld [vmem:[%s1560 + $0x28] sm:$0xf]
        %v1572 = vld [vmem:[%s1560 + $0x2c] sm:$0xf]
        %v1573 = vld [vmem:[%s1560 + $0x30] sm:$0xf]
        %v1574 = vld [vmem:[%s1560 + $0x34] sm:$0xf]
        %v1575 = vld [vmem:[%s1560 + $0x38] sm:$0xf]
        %v1576 = vld [vmem:[%s1560 + $0x3c] sm:$0xf]
        %s1577 = scalar_lea.vmem %s3, 4
        %v1578 = vld [vmem:[%s1577] sm:$0x1]
        %v1580 = vlaneseq
        %v1581 = vshrl.u32 %v1580, 7
        %v1582 = vsub.s32 0, %v1581
        %v1583 = vrot.slane %v1578, %v1582
        %v1601 = vunpack.c.l.b16 %v1561
        %v1602 = vunpack.c.l.b16 %v1562
        %v1603 = vunpack.c.l.b16 %v1563
        %v1604 = vunpack.c.l.b16 %v1564
        %v1605 = vunpack.c.l.b16 %v1565
        %v1606 = vunpack.c.l.b16 %v1566
        %v1607 = vunpack.c.l.b16 %v1567
        %v1608 = vunpack.c.l.b16 %v1568
        %v1609 = vunpack.c.l.b16 %v1569
        %v1610 = vunpack.c.l.b16 %v1570
        %v1611 = vunpack.c.l.b16 %v1571
        %v1612 = vunpack.c.l.b16 %v1572
        %v1613 = vunpack.c.l.b16 %v1573
        %v1614 = vunpack.c.l.b16 %v1574
        %v1615 = vunpack.c.l.b16 %v1575
        %v1616 = vunpack.c.l.b16 %v1576
        %v1617 = vpack.c.b16 %v1602, %v1601
        %v1618 = vpack.c.b16 %v1604, %v1603
        %v1619 = vpack.c.b16 %v1606, %v1605
        %v1620 = vpack.c.b16 %v1608, %v1607
        %v1621 = vpack.c.b16 %v1610, %v1609
        %v1622 = vpack.c.b16 %v1612, %v1611
        %v1623 = vpack.c.b16 %v1614, %v1613
        %v1624 = vpack.c.b16 %v1616, %v1615
        %1633 = vmatprep.subr.bf16.mxu0 0
        %1634 = vmatpush1.bf16.msra.mxu0 %v1617
        %1635 = vmatprep.subr.bf16.mxu0 0
        %1636 = vmatpush1.bf16.msra.mxu0 %v1618
        %1637 = vmatprep.subr.bf16.mxu0 0
        %1638 = vmatpush1.bf16.msra.mxu0 %v1619
        %1639 = vmatprep.subr.bf16.mxu0 0
        %1640 = vmatpush1.bf16.msra.mxu0 %v1620
        %1641 = vmatprep.subr.bf16.mxu0 0
        %1642 = vmatpush1.bf16.msra.mxu0 %v1621
        %1643 = vmatprep.subr.bf16.mxu0 0
        %1644 = vmatpush1.bf16.msra.mxu0 %v1622
        %1645 = vmatprep.subr.bf16.mxu0 0
        %1646 = vmatpush1.bf16.msra.mxu0 %v1623
        %1647 = vmatprep.subr.bf16.mxu0 0
        %1648 = vmatpush1.bf16.msra.mxu0 %v1624
        %1649 = vmatprep.subr.bf16.mxu0 0
        %1650 = vmatpush1.bf16.msra.mxu0 0
        %1651 = vmatprep.subr.bf16.mxu0 0
        %1652 = vmatpush1.bf16.msra.mxu0 0
        %1653 = vmatprep.subr.bf16.mxu0 0
        %1654 = vmatpush1.bf16.msra.mxu0 0
        %1655 = vmatprep.subr.bf16.mxu0 0
        %1656 = vmatpush1.bf16.msra.mxu0 0
        %1657 = vmatprep.subr.bf16.mxu0 0
        %1658 = vmatpush1.bf16.msra.mxu0 0
        %1659 = vmatprep.subr.bf16.mxu0 0
        %1660 = vmatpush1.bf16.msra.mxu0 0
        %1661 = vmatprep.subr.bf16.mxu0 0
        %1662 = vmatpush1.bf16.msra.mxu0 0
        %1663 = vmatprep.subr.bf16.mxu0 0
        %1664 = vmatpush1.bf16.msra.mxu0 0
        %1665 = vmatprep.mubr.bf16.mxu0 0
        %1666 = vmatmul.mubr.bf16.gmra.mrb[0].mxu0 %v1544
        %v1667 = vpop.f32.mrb[0].mxu0
        %v1668 = vadd.f32 %v1583, %v1667
        %v1669 = vpop.f32.mrb[0].mxu0
        %v1670 = vpop.f32.mrb[0].mxu0
        %v1671 = vadd.f32 %v1583, %v1670
        %v1672 = vpop.f32.mrb[0].mxu0
        %1673 = vmatprep.mubr.bf16.mxu0 0
        %1674 = vmatmul.mubr.bf16.gmra.mrb[0].mxu0 %v1545
        %v1675 = vpop.f32.mrb[0].mxu0
        %v1676 = vadd.f32 %v1583, %v1675
        %v1677 = vpop.f32.mrb[0].mxu0
        %v1678 = vpop.f32.mrb[0].mxu0
        %v1679 = vadd.f32 %v1583, %v1678
        %v1680 = vpop.f32.mrb[0].mxu0
        %1681 = vmatprep.mubr.bf16.mxu0 0
        %1682 = vmatmul.mubr.bf16.gmra.mrb[0].mxu0 %v1546
        %v1683 = vpop.f32.mrb[0].mxu0
        %v1684 = vadd.f32 %v1583, %v1683
        %v1685 = vpop.f32.mrb[0].mxu0
        %v1686 = vpop.f32.mrb[0].mxu0
        %v1687 = vadd.f32 %v1583, %v1686
        %v1688 = vpop.f32.mrb[0].mxu0
        %1689 = vmatprep.mubr.bf16.mxu0 0
        %1690 = vmatmul.mubr.bf16.gmra.mrb[0].mxu0 %v1547
        %v1691 = vpop.f32.mrb[0].mxu0
        %v1692 = vadd.f32 %v1583, %v1691
        %v1693 = vpop.f32.mrb[0].mxu0
        %v1694 = vpop.f32.mrb[0].mxu0
        %v1695 = vadd.f32 %v1583, %v1694
        %v1696 = vpop.f32.mrb[0].mxu0
        %1697 = vmatprep.mubr.bf16.mxu0 0
        %1698 = vmatmul.mubr.bf16.gmra.mrb[0].mxu0 %v1548
        %v1699 = vpop.f32.mrb[0].mxu0
        %v1700 = vadd.f32 %v1583, %v1699
        %v1701 = vpop.f32.mrb[0].mxu0
        %v1702 = vpop.f32.mrb[0].mxu0
        %v1703 = vadd.f32 %v1583, %v1702
        %v1704 = vpop.f32.mrb[0].mxu0
        %1705 = vmatprep.mubr.bf16.mxu0 0
        %1706 = vmatmul.mubr.bf16.gmra.mrb[0].mxu0 %v1549
        %v1707 = vpop.f32.mrb[0].mxu0
        %v1708 = vadd.f32 %v1583, %v1707
        %v1709 = vpop.f32.mrb[0].mxu0
        %v1710 = vpop.f32.mrb[0].mxu0
        %v1711 = vadd.f32 %v1583, %v1710
        %v1712 = vpop.f32.mrb[0].mxu0
        %1713 = vmatprep.mubr.bf16.mxu0 0
        %1714 = vmatmul.mubr.bf16.gmra.mrb[0].mxu0 %v1550
        %v1715 = vpop.f32.mrb[0].mxu0
        %v1716 = vadd.f32 %v1583, %v1715
        %v1717 = vpop.f32.mrb[0].mxu0
        %v1718 = vpop.f32.mrb[0].mxu0
        %v1719 = vadd.f32 %v1583, %v1718
        %v1720 = vpop.f32.mrb[0].mxu0
        %1721 = vmatprep.mubr.bf16.mxu0 0
        %1722 = vmatmul.mubr.bf16.gmra.mrb[0].mxu0 %v1551
        %v1723 = vpop.f32.mrb[0].mxu0
        %v1724 = vadd.f32 %v1583, %v1723
        %v1725 = vpop.f32.mrb[0].mxu0
        %v1726 = vpop.f32.mrb[0].mxu0
        %v1727 = vadd.f32 %v1583, %v1726
        %v1728 = vpop.f32.mrb[0].mxu0
        %1729 = vmatprep.mubr.bf16.mxu0 0
        %1730 = vmatmul.mubr.bf16.gmra.mrb[0].mxu0 %v1552
        %v1731 = vpop.f32.mrb[0].mxu0
        %v1732 = vadd.f32 %v1583, %v1731
        %v1733 = vpop.f32.mrb[0].mxu0
        %v1734 = vpop.f32.mrb[0].mxu0
        %v1735 = vadd.f32 %v1583, %v1734
        %v1736 = vpop.f32.mrb[0].mxu0
        %1737 = vmatprep.mubr.bf16.mxu0 0
        %1738 = vmatmul.mubr.bf16.gmra.mrb[0].mxu0 %v1553
        %v1739 = vpop.f32.mrb[0].mxu0
        %v1740 = vadd.f32 %v1583, %v1739
        %v1741 = vpop.f32.mrb[0].mxu0
        %v1742 = vpop.f32.mrb[0].mxu0
        %v1743 = vadd.f32 %v1583, %v1742
        %v1744 = vpop.f32.mrb[0].mxu0
        %1745 = vmatprep.mubr.bf16.mxu0 0
        %1746 = vmatmul.mubr.bf16.gmra.mrb[0].mxu0 %v1554
        %v1747 = vpop.f32.mrb[0].mxu0
        %v1748 = vadd.f32 %v1583, %v1747
        %v1749 = vpop.f32.mrb[0].mxu0
        %v1750 = vpop.f32.mrb[0].mxu0
        %v1751 = vadd.f32 %v1583, %v1750
        %v1752 = vpop.f32.mrb[0].mxu0
        %1753 = vmatprep.mubr.bf16.mxu0 0
        %1754 = vmatmul.mubr.bf16.gmra.mrb[0].mxu0 %v1555
        %v1755 = vpop.f32.mrb[0].mxu0
        %v1756 = vadd.f32 %v1583, %v1755
        %v1757 = vpop.f32.mrb[0].mxu0
        %v1758 = vpop.f32.mrb[0].mxu0
        %v1759 = vadd.f32 %v1583, %v1758
        %v1760 = vpop.f32.mrb[0].mxu0
        %1761 = vmatprep.mubr.bf16.mxu0 0
        %1762 = vmatmul.mubr.bf16.gmra.mrb[0].mxu0 %v1556
        %v1763 = vpop.f32.mrb[0].mxu0
        %v1764 = vadd.f32 %v1583, %v1763
        %v1765 = vpop.f32.mrb[0].mxu0
        %v1766 = vpop.f32.mrb[0].mxu0
        %v1767 = vadd.f32 %v1583, %v1766
        %v1768 = vpop.f32.mrb[0].mxu0
        %1769 = vmatprep.mubr.bf16.mxu0 0
        %1770 = vmatmul.mubr.bf16.gmra.mrb[0].mxu0 %v1557
        %v1771 = vpop.f32.mrb[0].mxu0
        %v1772 = vadd.f32 %v1583, %v1771
        %v1773 = vpop.f32.mrb[0].mxu0
        %v1774 = vpop.f32.mrb[0].mxu0
        %v1775 = vadd.f32 %v1583, %v1774
        %v1776 = vpop.f32.mrb[0].mxu0
        %1777 = vmatprep.mubr.bf16.mxu0 0
        %1778 = vmatmul.mubr.bf16.gmra.mrb[0].mxu0 %v1558
        %v1779 = vpop.f32.mrb[0].mxu0
        %v1780 = vadd.f32 %v1583, %v1779
        %v1781 = vpop.f32.mrb[0].mxu0
        %v1782 = vpop.f32.mrb[0].mxu0
        %v1783 = vadd.f32 %v1583, %v1782
        %v1784 = vpop.f32.mrb[0].mxu0
        %1785 = vmatprep.mubr.bf16.mxu0 0
        %1786 = vmatmul.mubr.bf16.gmra.mrb[0].mxu0 %v1559
        %v1787 = vpop.f32.mrb[0].mxu0
        %v1788 = vadd.f32 %v1583, %v1787
        %v1789 = vpop.f32.mrb[0].mxu0
        %v1790 = vpop.f32.mrb[0].mxu0
        %v1791 = vadd.f32 %v1583, %v1790
        %v1792 = vpop.f32.mrb[0].mxu0
        %1793 = vdwg.mxu0
        %s1794 = scalar_lea.vmem [#allocation7], 320
        %v1795 = vld [vmem:[%s1794] sm:$0xf]
        %v1796 = vld [vmem:[%s1794 + $0x4] sm:$0xf]
        %v1797 = vld [vmem:[%s1794 + $0x8] sm:$0xf]
        %v1798 = vld [vmem:[%s1794 + $0xc] sm:$0xf]
        %v1799 = vld [vmem:[%s1794 + $0x10] sm:$0xf]
        %v1800 = vld [vmem:[%s1794 + $0x14] sm:$0xf]
        %v1801 = vld [vmem:[%s1794 + $0x18] sm:$0xf]
        %v1802 = vld [vmem:[%s1794 + $0x1c] sm:$0xf]
        %v1803 = vld [vmem:[%s1794 + $0x20] sm:$0xf]
        %v1804 = vld [vmem:[%s1794 + $0x24] sm:$0xf]
        %v1805 = vld [vmem:[%s1794 + $0x28] sm:$0xf]
        %v1806 = vld [vmem:[%s1794 + $0x2c] sm:$0xf]
        %v1807 = vld [vmem:[%s1794 + $0x30] sm:$0xf]
        %v1808 = vld [vmem:[%s1794 + $0x34] sm:$0xf]
        %v1809 = vld [vmem:[%s1794 + $0x38] sm:$0xf]
        %v1810 = vld [vmem:[%s1794 + $0x3c] sm:$0xf]
        %s1811 = scalar_lea.vmem %s3, 5
        %v1812 = vld [vmem:[%s1811] sm:$0x1]
        %v1814 = vlaneseq
        %v1815 = vshrl.u32 %v1814, 7
        %v1816 = vsub.s32 0, %v1815
        %v1817 = vrot.slane %v1812, %v1816
        %v1835 = vunpack.c.l.b16 %v1795
        %v1836 = vunpack.c.l.b16 %v1796
        %v1837 = vunpack.c.l.b16 %v1797
        %v1838 = vunpack.c.l.b16 %v1798
        %v1839 = vunpack.c.l.b16 %v1799
        %v1840 = vunpack.c.l.b16 %v1800
        %v1841 = vunpack.c.l.b16 %v1801
        %v1842 = vunpack.c.l.b16 %v1802
        %v1843 = vunpack.c.l.b16 %v1803
        %v1844 = vunpack.c.l.b16 %v1804
        %v1845 = vunpack.c.l.b16 %v1805
        %v1846 = vunpack.c.l.b16 %v1806
        %v1847 = vunpack.c.l.b16 %v1807
        %v1848 = vunpack.c.l.b16 %v1808
        %v1849 = vunpack.c.l.b16 %v1809
        %v1850 = vunpack.c.l.b16 %v1810
        %v1851 = vpack.c.b16 %v1836, %v1835
        %v1852 = vpack.c.b16 %v1838, %v1837
        %v1853 = vpack.c.b16 %v1840, %v1839
        %v1854 = vpack.c.b16 %v1842, %v1841
        %v1855 = vpack.c.b16 %v1844, %v1843
        %v1856 = vpack.c.b16 %v1846, %v1845
        %v1857 = vpack.c.b16 %v1848, %v1847
        %v1858 = vpack.c.b16 %v1850, %v1849
        %1867 = vmatprep.subr.bf16.mxu0 0
        %1868 = vmatpush1.bf16.msra.mxu0 %v1851
        %1869 = vmatprep.subr.bf16.mxu0 0
        %1870 = vmatpush1.bf16.msra.mxu0 %v1852
        %1871 = vmatprep.subr.bf16.mxu0 0
        %1872 = vmatpush1.bf16.msra.mxu0 %v1853
        %1873 = vmatprep.subr.bf16.mxu0 0
        %1874 = vmatpush1.bf16.msra.mxu0 %v1854
        %1875 = vmatprep.subr.bf16.mxu0 0
        %1876 = vmatpush1.bf16.msra.mxu0 %v1855
        %1877 = vmatprep.subr.bf16.mxu0 0
        %1878 = vmatpush1.bf16.msra.mxu0 %v1856
        %1879 = vmatprep.subr.bf16.mxu0 0
        %1880 = vmatpush1.bf16.msra.mxu0 %v1857
        %1881 = vmatprep.subr.bf16.mxu0 0
        %1882 = vmatpush1.bf16.msra.mxu0 %v1858
        %1883 = vmatprep.subr.bf16.mxu0 0
        %1884 = vmatpush1.bf16.msra.mxu0 0
        %1885 = vmatprep.subr.bf16.mxu0 0
        %1886 = vmatpush1.bf16.msra.mxu0 0
        %1887 = vmatprep.subr.bf16.mxu0 0
        %1888 = vmatpush1.bf16.msra.mxu0 0
        %1889 = vmatprep.subr.bf16.mxu0 0
        %1890 = vmatpush1.bf16.msra.mxu0 0
        %1891 = vmatprep.subr.bf16.mxu0 0
        %1892 = vmatpush1.bf16.msra.mxu0 0
        %1893 = vmatprep.subr.bf16.mxu0 0
        %1894 = vmatpush1.bf16.msra.mxu0 0
        %1895 = vmatprep.subr.bf16.mxu0 0
        %1896 = vmatpush1.bf16.msra.mxu0 0
        %1897 = vmatprep.subr.bf16.mxu0 0
        %1898 = vmatpush1.bf16.msra.mxu0 0
        %1899 = vmatprep.mubr.bf16.mxu0 0
        %1900 = vmatmul.mubr.bf16.gmra.mrb[0].mxu0 %v338
        %v1901 = vpop.f32.mrb[0].mxu0
        %v1902 = vadd.f32 %v1817, %v1901
        %v1903 = vpop.f32.mrb[0].mxu0
        %v1904 = vpop.f32.mrb[0].mxu0
        %v1905 = vadd.f32 %v1817, %v1904
        %v1906 = vpop.f32.mrb[0].mxu0
        %1907 = vmatprep.mubr.bf16.mxu0 0
        %1908 = vmatmul.mubr.bf16.gmra.mrb[0].mxu0 %v339
        %v1909 = vpop.f32.mrb[0].mxu0
        %v1910 = vadd.f32 %v1817, %v1909
        %v1911 = vpop.f32.mrb[0].mxu0
        %v1912 = vpop.f32.mrb[0].mxu0
        %v1913 = vadd.f32 %v1817, %v1912
        %v1914 = vpop.f32.mrb[0].mxu0
        %1915 = vmatprep.mubr.bf16.mxu0 0
        %1916 = vmatmul.mubr.bf16.gmra.mrb[0].mxu0 %v340
        %v1917 = vpop.f32.mrb[0].mxu0
        %v1918 = vadd.f32 %v1817, %v1917
        %v1919 = vpop.f32.mrb[0].mxu0
        %v1920 = vpop.f32.mrb[0].mxu0
        %v1921 = vadd.f32 %v1817, %v1920
        %v1922 = vpop.f32.mrb[0].mxu0
        %1923 = vmatprep.mubr.bf16.mxu0 0
        %1924 = vmatmul.mubr.bf16.gmra.mrb[0].mxu0 %v341
        %v1925 = vpop.f32.mrb[0].mxu0
        %v1926 = vadd.f32 %v1817, %v1925
        %v1927 = vpop.f32.mrb[0].mxu0
        %v1928 = vpop.f32.mrb[0].mxu0
        %v1929 = vadd.f32 %v1817, %v1928
        %v1930 = vpop.f32.mrb[0].mxu0
        %1931 = vmatprep.mubr.bf16.mxu0 0
        %1932 = vmatmul.mubr.bf16.gmra.mrb[0].mxu0 %v342
        %v1933 = vpop.f32.mrb[0].mxu0
        %v1934 = vadd.f32 %v1817, %v1933
        %v1935 = vpop.f32.mrb[0].mxu0
        %v1936 = vpop.f32.mrb[0].mxu0
        %v1937 = vadd.f32 %v1817, %v1936
        %v1938 = vpop.f32.mrb[0].mxu0
        %1939 = vmatprep.mubr.bf16.mxu0 0
        %1940 = vmatmul.mubr.bf16.gmra.mrb[0].mxu0 %v343
        %v1941 = vpop.f32.mrb[0].mxu0
        %v1942 = vadd.f32 %v1817, %v1941
        %v1943 = vpop.f32.mrb[0].mxu0
        %v1944 = vpop.f32.mrb[0].mxu0
        %v1945 = vadd.f32 %v1817, %v1944
        %v1946 = vpop.f32.mrb[0].mxu0
        %1947 = vmatprep.mubr.bf16.mxu0 0
        %1948 = vmatmul.mubr.bf16.gmra.mrb[0].mxu0 %v344
        %v1949 = vpop.f32.mrb[0].mxu0
        %v1950 = vadd.f32 %v1817, %v1949
        %v1951 = vpop.f32.mrb[0].mxu0
        %v1952 = vpop.f32.mrb[0].mxu0
        %v1953 = vadd.f32 %v1817, %v1952
        %v1954 = vpop.f32.mrb[0].mxu0
        %1955 = vmatprep.mubr.bf16.mxu0 0
        %1956 = vmatmul.mubr.bf16.gmra.mrb[0].mxu0 %v345
        %v1957 = vpop.f32.mrb[0].mxu0
        %v1958 = vadd.f32 %v1817, %v1957
        %v1959 = vpop.f32.mrb[0].mxu0
        %v1960 = vpop.f32.mrb[0].mxu0
        %v1961 = vadd.f32 %v1817, %v1960
        %v1962 = vpop.f32.mrb[0].mxu0
        %1963 = vmatprep.mubr.bf16.mxu0 0
        %1964 = vmatmul.mubr.bf16.gmra.mrb[0].mxu0 %v346
        %v1965 = vpop.f32.mrb[0].mxu0
        %v1966 = vadd.f32 %v1817, %v1965
        %v1967 = vpop.f32.mrb[0].mxu0
        %v1968 = vpop.f32.mrb[0].mxu0
        %v1969 = vadd.f32 %v1817, %v1968
        %v1970 = vpop.f32.mrb[0].mxu0
        %1971 = vmatprep.mubr.bf16.mxu0 0
        %1972 = vmatmul.mubr.bf16.gmra.mrb[0].mxu0 %v347
        %v1973 = vpop.f32.mrb[0].mxu0
        %v1974 = vadd.f32 %v1817, %v1973
        %v1975 = vpop.f32.mrb[0].mxu0
        %v1976 = vpop.f32.mrb[0].mxu0
        %v1977 = vadd.f32 %v1817, %v1976
        %v1978 = vpop.f32.mrb[0].mxu0
        %1979 = vmatprep.mubr.bf16.mxu0 0
        %1980 = vmatmul.mubr.bf16.gmra.mrb[0].mxu0 %v348
        %v1981 = vpop.f32.mrb[0].mxu0
        %v1982 = vadd.f32 %v1817, %v1981
        %v1983 = vpop.f32.mrb[0].mxu0
        %v1984 = vpop.f32.mrb[0].mxu0
        %v1985 = vadd.f32 %v1817, %v1984
        %v1986 = vpop.f32.mrb[0].mxu0
        %1987 = vmatprep.mubr.bf16.mxu0 0
        %1988 = vmatmul.mubr.bf16.gmra.mrb[0].mxu0 %v349
        %v1989 = vpop.f32.mrb[0].mxu0
        %v1990 = vadd.f32 %v1817, %v1989
        %v1991 = vpop.f32.mrb[0].mxu0
        %v1992 = vpop.f32.mrb[0].mxu0
        %v1993 = vadd.f32 %v1817, %v1992
        %v1994 = vpop.f32.mrb[0].mxu0
        %1995 = vmatprep.mubr.bf16.mxu0 0
        %1996 = vmatmul.mubr.bf16.gmra.mrb[0].mxu0 %v350
        %v1997 = vpop.f32.mrb[0].mxu0
        %v1998 = vadd.f32 %v1817, %v1997
        %v1999 = vpop.f32.mrb[0].mxu0
        %v2000 = vpop.f32.mrb[0].mxu0
        %v2001 = vadd.f32 %v1817, %v2000
        %v2002 = vpop.f32.mrb[0].mxu0
        %2003 = vmatprep.mubr.bf16.mxu0 0
        %2004 = vmatmul.mubr.bf16.gmra.mrb[0].mxu0 %v351
        %v2005 = vpop.f32.mrb[0].mxu0
        %v2006 = vadd.f32 %v1817, %v2005
        %v2007 = vpop.f32.mrb[0].mxu0
        %v2008 = vpop.f32.mrb[0].mxu0
        %v2009 = vadd.f32 %v1817, %v2008
        %v2010 = vpop.f32.mrb[0].mxu0
        %2011 = vmatprep.mubr.bf16.mxu0 0
        %2012 = vmatmul.mubr.bf16.gmra.mrb[0].mxu0 %v352
        %v2013 = vpop.f32.mrb[0].mxu0
        %v2014 = vadd.f32 %v1817, %v2013
        %v2015 = vpop.f32.mrb[0].mxu0
        %v2016 = vpop.f32.mrb[0].mxu0
        %v2017 = vadd.f32 %v1817, %v2016
        %v2018 = vpop.f32.mrb[0].mxu0
        %2019 = vmatprep.mubr.bf16.mxu0 0
        %2020 = vmatmul.mubr.bf16.gmra.mrb[0].mxu0 %v353
        %v2021 = vpop.f32.mrb[0].mxu0
        %v2022 = vadd.f32 %v1817, %v2021
        %v2023 = vpop.f32.mrb[0].mxu0
        %v2024 = vpop.f32.mrb[0].mxu0
        %v2025 = vadd.f32 %v1817, %v2024
        %v2026 = vpop.f32.mrb[0].mxu0
        %2027 = vdwg.mxu0
        %v2028 = vadd.f32 %v1668, %v1902
        %v2029 = vadd.f32 %v1671, %v1905
        %v2030 = vadd.f32 %v1676, %v1910
        %v2031 = vadd.f32 %v1679, %v1913
        %v2032 = vadd.f32 %v1684, %v1918
        %v2033 = vadd.f32 %v1687, %v1921
        %v2034 = vadd.f32 %v1692, %v1926
        %v2035 = vadd.f32 %v1695, %v1929
        %v2036 = vadd.f32 %v1700, %v1934
        %v2037 = vadd.f32 %v1703, %v1937
        %v2038 = vadd.f32 %v1708, %v1942
        %v2039 = vadd.f32 %v1711, %v1945
        %v2040 = vadd.f32 %v1716, %v1950
        %v2041 = vadd.f32 %v1719, %v1953
        %v2042 = vadd.f32 %v1724, %v1958
        %v2043 = vadd.f32 %v1727, %v1961
        %v2044 = vadd.f32 %v1732, %v1966
        %v2045 = vadd.f32 %v1735, %v1969
        %v2046 = vadd.f32 %v1740, %v1974
        %v2047 = vadd.f32 %v1743, %v1977
        %v2048 = vadd.f32 %v1748, %v1982
        %v2049 = vadd.f32 %v1751, %v1985
        %v2050 = vadd.f32 %v1756, %v1990
        %v2051 = vadd.f32 %v1759, %v1993
        %v2052 = vadd.f32 %v1764, %v1998
        %v2053 = vadd.f32 %v1767, %v2001
        %v2054 = vadd.f32 %v1772, %v2006
        %v2055 = vadd.f32 %v1775, %v2009
        %v2056 = vadd.f32 %v1780, %v2014
        %v2057 = vadd.f32 %v1783, %v2017
        %v2058 = vadd.f32 %v1788, %v2022
        %v2059 = vadd.f32 %v1791, %v2025
        %v2060 = vmax.f32 %v2028, 0.0
        %v2061 = vmax.f32 %v2029, 0.0
        %v2062 = vmax.f32 %v2030, 0.0
        %v2063 = vmax.f32 %v2031, 0.0
        %v2064 = vmax.f32 %v2032, 0.0
        %v2065 = vmax.f32 %v2033, 0.0
        %v2066 = vmax.f32 %v2034, 0.0
        %v2067 = vmax.f32 %v2035, 0.0
        %v2068 = vmax.f32 %v2036, 0.0
        %v2069 = vmax.f32 %v2037, 0.0
        %v2070 = vmax.f32 %v2038, 0.0
        %v2071 = vmax.f32 %v2039, 0.0
        %v2072 = vmax.f32 %v2040, 0.0
        %v2073 = vmax.f32 %v2041, 0.0
        %v2074 = vmax.f32 %v2042, 0.0
        %v2075 = vmax.f32 %v2043, 0.0
        %v2076 = vmax.f32 %v2044, 0.0
        %v2077 = vmax.f32 %v2045, 0.0
        %v2078 = vmax.f32 %v2046, 0.0
        %v2079 = vmax.f32 %v2047, 0.0
        %v2080 = vmax.f32 %v2048, 0.0
        %v2081 = vmax.f32 %v2049, 0.0
        %v2082 = vmax.f32 %v2050, 0.0
        %v2083 = vmax.f32 %v2051, 0.0
        %v2084 = vmax.f32 %v2052, 0.0
        %v2085 = vmax.f32 %v2053, 0.0
        %v2086 = vmax.f32 %v2054, 0.0
        %v2087 = vmax.f32 %v2055, 0.0
        %v2088 = vmax.f32 %v2056, 0.0
        %v2089 = vmax.f32 %v2057, 0.0
        %v2090 = vmax.f32 %v2058, 0.0
        %v2091 = vmax.f32 %v2059, 0.0
        %v2092 = vpack.c.bf16 %v2061, %v2060
        %v2093 = vpack.c.bf16 %v2063, %v2062
        %v2094 = vpack.c.bf16 %v2065, %v2064
        %v2095 = vpack.c.bf16 %v2067, %v2066
        %v2096 = vpack.c.bf16 %v2069, %v2068
        %v2097 = vpack.c.bf16 %v2071, %v2070
        %v2098 = vpack.c.bf16 %v2073, %v2072
        %v2099 = vpack.c.bf16 %v2075, %v2074
        %v2100 = vpack.c.bf16 %v2077, %v2076
        %v2101 = vpack.c.bf16 %v2079, %v2078
        %v2102 = vpack.c.bf16 %v2081, %v2080
        %v2103 = vpack.c.bf16 %v2083, %v2082
        %v2104 = vpack.c.bf16 %v2085, %v2084
        %v2105 = vpack.c.bf16 %v2087, %v2086
        %v2106 = vpack.c.bf16 %v2089, %v2088
        %v2107 = vpack.c.bf16 %v2091, %v2090
        %s2108 = scalar_lea.vmem [#allocation7], 384
        %v2109 = vld [vmem:[%s2108] sm:$0xf]
        %v2110 = vld [vmem:[%s2108 + $0x4] sm:$0xf]
        %v2111 = vld [vmem:[%s2108 + $0x8] sm:$0xf]
        %v2112 = vld [vmem:[%s2108 + $0xc] sm:$0xf]
        %v2113 = vld [vmem:[%s2108 + $0x10] sm:$0xf]
        %v2114 = vld [vmem:[%s2108 + $0x14] sm:$0xf]
        %v2115 = vld [vmem:[%s2108 + $0x18] sm:$0xf]
        %v2116 = vld [vmem:[%s2108 + $0x1c] sm:$0xf]
        %v2117 = vld [vmem:[%s2108 + $0x20] sm:$0xf]
        %v2118 = vld [vmem:[%s2108 + $0x24] sm:$0xf]
        %v2119 = vld [vmem:[%s2108 + $0x28] sm:$0xf]
        %v2120 = vld [vmem:[%s2108 + $0x2c] sm:$0xf]
        %v2121 = vld [vmem:[%s2108 + $0x30] sm:$0xf]
        %v2122 = vld [vmem:[%s2108 + $0x34] sm:$0xf]
        %v2123 = vld [vmem:[%s2108 + $0x38] sm:$0xf]
        %v2124 = vld [vmem:[%s2108 + $0x3c] sm:$0xf]
        %s2125 = scalar_lea.vmem %s3, 6
        %v2126 = vld [vmem:[%s2125] sm:$0x1]
        %v2128 = vlaneseq
        %v2129 = vshrl.u32 %v2128, 7
        %v2130 = vsub.s32 0, %v2129
        %v2131 = vrot.slane %v2126, %v2130
        %v2149 = vunpack.c.l.b16 %v2109
        %v2150 = vunpack.c.l.b16 %v2110
        %v2151 = vunpack.c.l.b16 %v2111
        %v2152 = vunpack.c.l.b16 %v2112
        %v2153 = vunpack.c.l.b16 %v2113
        %v2154 = vunpack.c.l.b16 %v2114
        %v2155 = vunpack.c.l.b16 %v2115
        %v2156 = vunpack.c.l.b16 %v2116
        %v2157 = vunpack.c.l.b16 %v2117
        %v2158 = vunpack.c.l.b16 %v2118
        %v2159 = vunpack.c.l.b16 %v2119
        %v2160 = vunpack.c.l.b16 %v2120
        %v2161 = vunpack.c.l.b16 %v2121
        %v2162 = vunpack.c.l.b16 %v2122
        %v2163 = vunpack.c.l.b16 %v2123
        %v2164 = vunpack.c.l.b16 %v2124
        %v2165 = vpack.c.b16 %v2150, %v2149
        %v2166 = vpack.c.b16 %v2152, %v2151
        %v2167 = vpack.c.b16 %v2154, %v2153
        %v2168 = vpack.c.b16 %v2156, %v2155
        %v2169 = vpack.c.b16 %v2158, %v2157
        %v2170 = vpack.c.b16 %v2160, %v2159
        %v2171 = vpack.c.b16 %v2162, %v2161
        %v2172 = vpack.c.b16 %v2164, %v2163
        %2181 = vmatprep.subr.bf16.mxu0 0
        %2182 = vmatpush1.bf16.msra.mxu0 %v2165
        %2183 = vmatprep.subr.bf16.mxu0 0
        %2184 = vmatpush1.bf16.msra.mxu0 %v2166
        %2185 = vmatprep.subr.bf16.mxu0 0
        %2186 = vmatpush1.bf16.msra.mxu0 %v2167
        %2187 = vmatprep.subr.bf16.mxu0 0
        %2188 = vmatpush1.bf16.msra.mxu0 %v2168
        %2189 = vmatprep.subr.bf16.mxu0 0
        %2190 = vmatpush1.bf16.msra.mxu0 %v2169
        %2191 = vmatprep.subr.bf16.mxu0 0
        %2192 = vmatpush1.bf16.msra.mxu0 %v2170
        %2193 = vmatprep.subr.bf16.mxu0 0
        %2194 = vmatpush1.bf16.msra.mxu0 %v2171
        %2195 = vmatprep.subr.bf16.mxu0 0
        %2196 = vmatpush1.bf16.msra.mxu0 %v2172
        %2197 = vmatprep.subr.bf16.mxu0 0
        %2198 = vmatpush1.bf16.msra.mxu0 0
        %2199 = vmatprep.subr.bf16.mxu0 0
        %2200 = vmatpush1.bf16.msra.mxu0 0
        %2201 = vmatprep.subr.bf16.mxu0 0
        %2202 = vmatpush1.bf16.msra.mxu0 0
        %2203 = vmatprep.subr.bf16.mxu0 0
        %2204 = vmatpush1.bf16.msra.mxu0 0
        %2205 = vmatprep.subr.bf16.mxu0 0
        %2206 = vmatpush1.bf16.msra.mxu0 0
        %2207 = vmatprep.subr.bf16.mxu0 0
        %2208 = vmatpush1.bf16.msra.mxu0 0
        %2209 = vmatprep.subr.bf16.mxu0 0
        %2210 = vmatpush1.bf16.msra.mxu0 0
        %2211 = vmatprep.subr.bf16.mxu0 0
        %2212 = vmatpush1.bf16.msra.mxu0 0
        %2213 = vmatprep.mubr.bf16.mxu0 0
        %2214 = vmatmul.mubr.bf16.gmra.mrb[0].mxu0 %v2092
        %v2215 = vpop.f32.mrb[0].mxu0
        %v2216 = vadd.f32 %v2131, %v2215
        %v2217 = vpop.f32.mrb[0].mxu0
        %v2218 = vpop.f32.mrb[0].mxu0
        %v2219 = vadd.f32 %v2131, %v2218
        %v2220 = vpop.f32.mrb[0].mxu0
        %2221 = vmatprep.mubr.bf16.mxu0 0
        %2222 = vmatmul.mubr.bf16.gmra.mrb[0].mxu0 %v2093
        %v2223 = vpop.f32.mrb[0].mxu0
        %v2224 = vadd.f32 %v2131, %v2223
        %v2225 = vpop.f32.mrb[0].mxu0
        %v2226 = vpop.f32.mrb[0].mxu0
        %v2227 = vadd.f32 %v2131, %v2226
        %v2228 = vpop.f32.mrb[0].mxu0
        %2229 = vmatprep.mubr.bf16.mxu0 0
        %2230 = vmatmul.mubr.bf16.gmra.mrb[0].mxu0 %v2094
        %v2231 = vpop.f32.mrb[0].mxu0
        %v2232 = vadd.f32 %v2131, %v2231
        %v2233 = vpop.f32.mrb[0].mxu0
        %v2234 = vpop.f32.mrb[0].mxu0
        %v2235 = vadd.f32 %v2131, %v2234
        %v2236 = vpop.f32.mrb[0].mxu0
        %2237 = vmatprep.mubr.bf16.mxu0 0
        %2238 = vmatmul.mubr.bf16.gmra.mrb[0].mxu0 %v2095
        %v2239 = vpop.f32.mrb[0].mxu0
        %v2240 = vadd.f32 %v2131, %v2239
        %v2241 = vpop.f32.mrb[0].mxu0
        %v2242 = vpop.f32.mrb[0].mxu0
        %v2243 = vadd.f32 %v2131, %v2242
        %v2244 = vpop.f32.mrb[0].mxu0
        %2245 = vmatprep.mubr.bf16.mxu0 0
        %2246 = vmatmul.mubr.bf16.gmra.mrb[0].mxu0 %v2096
        %v2247 = vpop.f32.mrb[0].mxu0
        %v2248 = vadd.f32 %v2131, %v2247
        %v2249 = vpop.f32.mrb[0].mxu0
        %v2250 = vpop.f32.mrb[0].mxu0
        %v2251 = vadd.f32 %v2131, %v2250
        %v2252 = vpop.f32.mrb[0].mxu0
        %2253 = vmatprep.mubr.bf16.mxu0 0
        %2254 = vmatmul.mubr.bf16.gmra.mrb[0].mxu0 %v2097
        %v2255 = vpop.f32.mrb[0].mxu0
        %v2256 = vadd.f32 %v2131, %v2255
        %v2257 = vpop.f32.mrb[0].mxu0
        %v2258 = vpop.f32.mrb[0].mxu0
        %v2259 = vadd.f32 %v2131, %v2258
        %v2260 = vpop.f32.mrb[0].mxu0
        %2261 = vmatprep.mubr.bf16.mxu0 0
        %2262 = vmatmul.mubr.bf16.gmra.mrb[0].mxu0 %v2098
        %v2263 = vpop.f32.mrb[0].mxu0
        %v2264 = vadd.f32 %v2131, %v2263
        %v2265 = vpop.f32.mrb[0].mxu0
        %v2266 = vpop.f32.mrb[0].mxu0
        %v2267 = vadd.f32 %v2131, %v2266
        %v2268 = vpop.f32.mrb[0].mxu0
        %2269 = vmatprep.mubr.bf16.mxu0 0
        %2270 = vmatmul.mubr.bf16.gmra.mrb[0].mxu0 %v2099
        %v2271 = vpop.f32.mrb[0].mxu0
        %v2272 = vadd.f32 %v2131, %v2271
        %v2273 = vpop.f32.mrb[0].mxu0
        %v2274 = vpop.f32.mrb[0].mxu0
        %v2275 = vadd.f32 %v2131, %v2274
        %v2276 = vpop.f32.mrb[0].mxu0
        %2277 = vmatprep.mubr.bf16.mxu0 0
        %2278 = vmatmul.mubr.bf16.gmra.mrb[0].mxu0 %v2100
        %v2279 = vpop.f32.mrb[0].mxu0
        %v2280 = vadd.f32 %v2131, %v2279
        %v2281 = vpop.f32.mrb[0].mxu0
        %v2282 = vpop.f32.mrb[0].mxu0
        %v2283 = vadd.f32 %v2131, %v2282
        %v2284 = vpop.f32.mrb[0].mxu0
        %2285 = vmatprep.mubr.bf16.mxu0 0
        %2286 = vmatmul.mubr.bf16.gmra.mrb[0].mxu0 %v2101
        %v2287 = vpop.f32.mrb[0].mxu0
        %v2288 = vadd.f32 %v2131, %v2287
        %v2289 = vpop.f32.mrb[0].mxu0
        %v2290 = vpop.f32.mrb[0].mxu0
        %v2291 = vadd.f32 %v2131, %v2290
        %v2292 = vpop.f32.mrb[0].mxu0
        %2293 = vmatprep.mubr.bf16.mxu0 0
        %2294 = vmatmul.mubr.bf16.gmra.mrb[0].mxu0 %v2102
        %v2295 = vpop.f32.mrb[0].mxu0
        %v2296 = vadd.f32 %v2131, %v2295
        %v2297 = vpop.f32.mrb[0].mxu0
        %v2298 = vpop.f32.mrb[0].mxu0
        %v2299 = vadd.f32 %v2131, %v2298
        %v2300 = vpop.f32.mrb[0].mxu0
        %2301 = vmatprep.mubr.bf16.mxu0 0
        %2302 = vmatmul.mubr.bf16.gmra.mrb[0].mxu0 %v2103
        %v2303 = vpop.f32.mrb[0].mxu0
        %v2304 = vadd.f32 %v2131, %v2303
        %v2305 = vpop.f32.mrb[0].mxu0
        %v2306 = vpop.f32.mrb[0].mxu0
        %v2307 = vadd.f32 %v2131, %v2306
        %v2308 = vpop.f32.mrb[0].mxu0
        %2309 = vmatprep.mubr.bf16.mxu0 0
        %2310 = vmatmul.mubr.bf16.gmra.mrb[0].mxu0 %v2104
        %v2311 = vpop.f32.mrb[0].mxu0
        %v2312 = vadd.f32 %v2131, %v2311
        %v2313 = vpop.f32.mrb[0].mxu0
        %v2314 = vpop.f32.mrb[0].mxu0
        %v2315 = vadd.f32 %v2131, %v2314
        %v2316 = vpop.f32.mrb[0].mxu0
        %2317 = vmatprep.mubr.bf16.mxu0 0
        %2318 = vmatmul.mubr.bf16.gmra.mrb[0].mxu0 %v2105
        %v2319 = vpop.f32.mrb[0].mxu0
        %v2320 = vadd.f32 %v2131, %v2319
        %v2321 = vpop.f32.mrb[0].mxu0
        %v2322 = vpop.f32.mrb[0].mxu0
        %v2323 = vadd.f32 %v2131, %v2322
        %v2324 = vpop.f32.mrb[0].mxu0
        %2325 = vmatprep.mubr.bf16.mxu0 0
        %2326 = vmatmul.mubr.bf16.gmra.mrb[0].mxu0 %v2106
        %v2327 = vpop.f32.mrb[0].mxu0
        %v2328 = vadd.f32 %v2131, %v2327
        %v2329 = vpop.f32.mrb[0].mxu0
        %v2330 = vpop.f32.mrb[0].mxu0
        %v2331 = vadd.f32 %v2131, %v2330
        %v2332 = vpop.f32.mrb[0].mxu0
        %2333 = vmatprep.mubr.bf16.mxu0 0
        %2334 = vmatmul.mubr.bf16.gmra.mrb[0].mxu0 %v2107
        %v2335 = vpop.f32.mrb[0].mxu0
        %v2336 = vadd.f32 %v2131, %v2335
        %v2337 = vpop.f32.mrb[0].mxu0
        %v2338 = vpop.f32.mrb[0].mxu0
        %v2339 = vadd.f32 %v2131, %v2338
        %v2340 = vpop.f32.mrb[0].mxu0
        %2341 = vdwg.mxu0
        %v2342 = vmax.f32 %v2216, 0.0
        %v2343 = vmax.f32 %v2219, 0.0
        %v2344 = vmax.f32 %v2224, 0.0
        %v2345 = vmax.f32 %v2227, 0.0
        %v2346 = vmax.f32 %v2232, 0.0
        %v2347 = vmax.f32 %v2235, 0.0
        %v2348 = vmax.f32 %v2240, 0.0
        %v2349 = vmax.f32 %v2243, 0.0
        %v2350 = vmax.f32 %v2248, 0.0
        %v2351 = vmax.f32 %v2251, 0.0
        %v2352 = vmax.f32 %v2256, 0.0
        %v2353 = vmax.f32 %v2259, 0.0
        %v2354 = vmax.f32 %v2264, 0.0
        %v2355 = vmax.f32 %v2267, 0.0
        %v2356 = vmax.f32 %v2272, 0.0
        %v2357 = vmax.f32 %v2275, 0.0
        %v2358 = vmax.f32 %v2280, 0.0
        %v2359 = vmax.f32 %v2283, 0.0
        %v2360 = vmax.f32 %v2288, 0.0
        %v2361 = vmax.f32 %v2291, 0.0
        %v2362 = vmax.f32 %v2296, 0.0
        %v2363 = vmax.f32 %v2299, 0.0
        %v2364 = vmax.f32 %v2304, 0.0
        %v2365 = vmax.f32 %v2307, 0.0
        %v2366 = vmax.f32 %v2312, 0.0
        %v2367 = vmax.f32 %v2315, 0.0
        %v2368 = vmax.f32 %v2320, 0.0
        %v2369 = vmax.f32 %v2323, 0.0
        %v2370 = vmax.f32 %v2328, 0.0
        %v2371 = vmax.f32 %v2331, 0.0
        %v2372 = vmax.f32 %v2336, 0.0
        %v2373 = vmax.f32 %v2339, 0.0
        %v2374 = vpack.c.bf16 %v2343, %v2342
        %v2375 = vpack.c.bf16 %v2345, %v2344
        %v2376 = vpack.c.bf16 %v2347, %v2346
        %v2377 = vpack.c.bf16 %v2349, %v2348
        %v2378 = vpack.c.bf16 %v2351, %v2350
        %v2379 = vpack.c.bf16 %v2353, %v2352
        %v2380 = vpack.c.bf16 %v2355, %v2354
        %v2381 = vpack.c.bf16 %v2357, %v2356
        %v2382 = vpack.c.bf16 %v2359, %v2358
        %v2383 = vpack.c.bf16 %v2361, %v2360
        %v2384 = vpack.c.bf16 %v2363, %v2362
        %v2385 = vpack.c.bf16 %v2365, %v2364
        %v2386 = vpack.c.bf16 %v2367, %v2366
        %v2387 = vpack.c.bf16 %v2369, %v2368
        %v2388 = vpack.c.bf16 %v2371, %v2370
        %v2389 = vpack.c.bf16 %v2373, %v2372
        %s2390 = scalar_lea.vmem [#allocation7], 448
        %v2391 = vld [vmem:[%s2390] sm:$0xf]
        %v2392 = vld [vmem:[%s2390 + $0x4] sm:$0xf]
        %v2393 = vld [vmem:[%s2390 + $0x8] sm:$0xf]
        %v2394 = vld [vmem:[%s2390 + $0xc] sm:$0xf]
        %v2395 = vld [vmem:[%s2390 + $0x10] sm:$0xf]
        %v2396 = vld [vmem:[%s2390 + $0x14] sm:$0xf]
        %v2397 = vld [vmem:[%s2390 + $0x18] sm:$0xf]
        %v2398 = vld [vmem:[%s2390 + $0x1c] sm:$0xf]
        %v2399 = vld [vmem:[%s2390 + $0x20] sm:$0xf]
        %v2400 = vld [vmem:[%s2390 + $0x24] sm:$0xf]
        %v2401 = vld [vmem:[%s2390 + $0x28] sm:$0xf]
        %v2402 = vld [vmem:[%s2390 + $0x2c] sm:$0xf]
        %v2403 = vld [vmem:[%s2390 + $0x30] sm:$0xf]
        %v2404 = vld [vmem:[%s2390 + $0x34] sm:$0xf]
        %v2405 = vld [vmem:[%s2390 + $0x38] sm:$0xf]
        %v2406 = vld [vmem:[%s2390 + $0x3c] sm:$0xf]
        %s2407 = scalar_lea.vmem %s3, 7
        %v2408 = vld [vmem:[%s2407] sm:$0x1]
        %v2410 = vlaneseq
        %v2411 = vshrl.u32 %v2410, 7
        %v2412 = vsub.s32 0, %v2411
        %v2413 = vrot.slane %v2408, %v2412
        %v2431 = vunpack.c.l.b16 %v2391
        %v2432 = vunpack.c.l.b16 %v2392
        %v2433 = vunpack.c.l.b16 %v2393
        %v2434 = vunpack.c.l.b16 %v2394
        %v2435 = vunpack.c.l.b16 %v2395
        %v2436 = vunpack.c.l.b16 %v2396
        %v2437 = vunpack.c.l.b16 %v2397
        %v2438 = vunpack.c.l.b16 %v2398
        %v2439 = vunpack.c.l.b16 %v2399
        %v2440 = vunpack.c.l.b16 %v2400
        %v2441 = vunpack.c.l.b16 %v2401
        %v2442 = vunpack.c.l.b16 %v2402
        %v2443 = vunpack.c.l.b16 %v2403
        %v2444 = vunpack.c.l.b16 %v2404
        %v2445 = vunpack.c.l.b16 %v2405
        %v2446 = vunpack.c.l.b16 %v2406
        %v2447 = vpack.c.b16 %v2432, %v2431
        %v2448 = vpack.c.b16 %v2434, %v2433
        %v2449 = vpack.c.b16 %v2436, %v2435
        %v2450 = vpack.c.b16 %v2438, %v2437
        %v2451 = vpack.c.b16 %v2440, %v2439
        %v2452 = vpack.c.b16 %v2442, %v2441
        %v2453 = vpack.c.b16 %v2444, %v2443
        %v2454 = vpack.c.b16 %v2446, %v2445
        %2463 = vmatprep.subr.bf16.mxu0 0
        %2464 = vmatpush1.bf16.msra.mxu0 %v2447
        %2465 = vmatprep.subr.bf16.mxu0 0
        %2466 = vmatpush1.bf16.msra.mxu0 %v2448
        %2467 = vmatprep.subr.bf16.mxu0 0
        %2468 = vmatpush1.bf16.msra.mxu0 %v2449
        %2469 = vmatprep.subr.bf16.mxu0 0
        %2470 = vmatpush1.bf16.msra.mxu0 %v2450
        %2471 = vmatprep.subr.bf16.mxu0 0
        %2472 = vmatpush1.bf16.msra.mxu0 %v2451
        %2473 = vmatprep.subr.bf16.mxu0 0
        %2474 = vmatpush1.bf16.msra.mxu0 %v2452
        %2475 = vmatprep.subr.bf16.mxu0 0
        %2476 = vmatpush1.bf16.msra.mxu0 %v2453
        %2477 = vmatprep.subr.bf16.mxu0 0
        %2478 = vmatpush1.bf16.msra.mxu0 %v2454
        %2479 = vmatprep.subr.bf16.mxu0 0
        %2480 = vmatpush1.bf16.msra.mxu0 0
        %2481 = vmatprep.subr.bf16.mxu0 0
        %2482 = vmatpush1.bf16.msra.mxu0 0
        %2483 = vmatprep.subr.bf16.mxu0 0
        %2484 = vmatpush1.bf16.msra.mxu0 0
        %2485 = vmatprep.subr.bf16.mxu0 0
        %2486 = vmatpush1.bf16.msra.mxu0 0
        %2487 = vmatprep.subr.bf16.mxu0 0
        %2488 = vmatpush1.bf16.msra.mxu0 0
        %2489 = vmatprep.subr.bf16.mxu0 0
        %2490 = vmatpush1.bf16.msra.mxu0 0
        %2491 = vmatprep.subr.bf16.mxu0 0
        %2492 = vmatpush1.bf16.msra.mxu0 0
        %2493 = vmatprep.subr.bf16.mxu0 0
        %2494 = vmatpush1.bf16.msra.mxu0 0
        %2495 = vmatprep.mubr.bf16.mxu0 0
        %2496 = vmatmul.mubr.bf16.gmra.mrb[0].mxu0 %v2374
        %v2497 = vpop.f32.mrb[0].mxu0
        %v2498 = vadd.f32 %v2413, %v2497
        %v2499 = vpop.f32.mrb[0].mxu0
        %v2500 = vpop.f32.mrb[0].mxu0
        %v2501 = vadd.f32 %v2413, %v2500
        %v2502 = vpop.f32.mrb[0].mxu0
        %2503 = vmatprep.mubr.bf16.mxu0 0
        %2504 = vmatmul.mubr.bf16.gmra.mrb[0].mxu0 %v2375
        %v2505 = vpop.f32.mrb[0].mxu0
        %v2506 = vadd.f32 %v2413, %v2505
        %v2507 = vpop.f32.mrb[0].mxu0
        %v2508 = vpop.f32.mrb[0].mxu0
        %v2509 = vadd.f32 %v2413, %v2508
        %v2510 = vpop.f32.mrb[0].mxu0
        %2511 = vmatprep.mubr.bf16.mxu0 0
        %2512 = vmatmul.mubr.bf16.gmra.mrb[0].mxu0 %v2376
        %v2513 = vpop.f32.mrb[0].mxu0
        %v2514 = vadd.f32 %v2413, %v2513
        %v2515 = vpop.f32.mrb[0].mxu0
        %v2516 = vpop.f32.mrb[0].mxu0
        %v2517 = vadd.f32 %v2413, %v2516
        %v2518 = vpop.f32.mrb[0].mxu0
        %2519 = vmatprep.mubr.bf16.mxu0 0
        %2520 = vmatmul.mubr.bf16.gmra.mrb[0].mxu0 %v2377
        %v2521 = vpop.f32.mrb[0].mxu0
        %v2522 = vadd.f32 %v2413, %v2521
        %v2523 = vpop.f32.mrb[0].mxu0
        %v2524 = vpop.f32.mrb[0].mxu0
        %v2525 = vadd.f32 %v2413, %v2524
        %v2526 = vpop.f32.mrb[0].mxu0
        %2527 = vmatprep.mubr.bf16.mxu0 0
        %2528 = vmatmul.mubr.bf16.gmra.mrb[0].mxu0 %v2378
        %v2529 = vpop.f32.mrb[0].mxu0
        %v2530 = vadd.f32 %v2413, %v2529
        %v2531 = vpop.f32.mrb[0].mxu0
        %v2532 = vpop.f32.mrb[0].mxu0
        %v2533 = vadd.f32 %v2413, %v2532
        %v2534 = vpop.f32.mrb[0].mxu0
        %2535 = vmatprep.mubr.bf16.mxu0 0
        %2536 = vmatmul.mubr.bf16.gmra.mrb[0].mxu0 %v2379
        %v2537 = vpop.f32.mrb[0].mxu0
        %v2538 = vadd.f32 %v2413, %v2537
        %v2539 = vpop.f32.mrb[0].mxu0
        %v2540 = vpop.f32.mrb[0].mxu0
        %v2541 = vadd.f32 %v2413, %v2540
        %v2542 = vpop.f32.mrb[0].mxu0
        %2543 = vmatprep.mubr.bf16.mxu0 0
        %2544 = vmatmul.mubr.bf16.gmra.mrb[0].mxu0 %v2380
        %v2545 = vpop.f32.mrb[0].mxu0
        %v2546 = vadd.f32 %v2413, %v2545
        %v2547 = vpop.f32.mrb[0].mxu0
        %v2548 = vpop.f32.mrb[0].mxu0
        %v2549 = vadd.f32 %v2413, %v2548
        %v2550 = vpop.f32.mrb[0].mxu0
        %2551 = vmatprep.mubr.bf16.mxu0 0
        %2552 = vmatmul.mubr.bf16.gmra.mrb[0].mxu0 %v2381
        %v2553 = vpop.f32.mrb[0].mxu0
        %v2554 = vadd.f32 %v2413, %v2553
        %v2555 = vpop.f32.mrb[0].mxu0
        %v2556 = vpop.f32.mrb[0].mxu0
        %v2557 = vadd.f32 %v2413, %v2556
        %v2558 = vpop.f32.mrb[0].mxu0
        %2559 = vmatprep.mubr.bf16.mxu0 0
        %2560 = vmatmul.mubr.bf16.gmra.mrb[0].mxu0 %v2382
        %v2561 = vpop.f32.mrb[0].mxu0
        %v2562 = vadd.f32 %v2413, %v2561
        %v2563 = vpop.f32.mrb[0].mxu0
        %v2564 = vpop.f32.mrb[0].mxu0
        %v2565 = vadd.f32 %v2413, %v2564
        %v2566 = vpop.f32.mrb[0].mxu0
        %2567 = vmatprep.mubr.bf16.mxu0 0
        %2568 = vmatmul.mubr.bf16.gmra.mrb[0].mxu0 %v2383
        %v2569 = vpop.f32.mrb[0].mxu0
        %v2570 = vadd.f32 %v2413, %v2569
        %v2571 = vpop.f32.mrb[0].mxu0
        %v2572 = vpop.f32.mrb[0].mxu0
        %v2573 = vadd.f32 %v2413, %v2572
        %v2574 = vpop.f32.mrb[0].mxu0
        %2575 = vmatprep.mubr.bf16.mxu0 0
        %2576 = vmatmul.mubr.bf16.gmra.mrb[0].mxu0 %v2384
        %v2577 = vpop.f32.mrb[0].mxu0
        %v2578 = vadd.f32 %v2413, %v2577
        %v2579 = vpop.f32.mrb[0].mxu0
        %v2580 = vpop.f32.mrb[0].mxu0
        %v2581 = vadd.f32 %v2413, %v2580
        %v2582 = vpop.f32.mrb[0].mxu0
        %2583 = vmatprep.mubr.bf16.mxu0 0
        %2584 = vmatmul.mubr.bf16.gmra.mrb[0].mxu0 %v2385
        %v2585 = vpop.f32.mrb[0].mxu0
        %v2586 = vadd.f32 %v2413, %v2585
        %v2587 = vpop.f32.mrb[0].mxu0
        %v2588 = vpop.f32.mrb[0].mxu0
        %v2589 = vadd.f32 %v2413, %v2588
        %v2590 = vpop.f32.mrb[0].mxu0
        %2591 = vmatprep.mubr.bf16.mxu0 0
        %2592 = vmatmul.mubr.bf16.gmra.mrb[0].mxu0 %v2386
        %v2593 = vpop.f32.mrb[0].mxu0
        %v2594 = vadd.f32 %v2413, %v2593
        %v2595 = vpop.f32.mrb[0].mxu0
        %v2596 = vpop.f32.mrb[0].mxu0
        %v2597 = vadd.f32 %v2413, %v2596
        %v2598 = vpop.f32.mrb[0].mxu0
        %2599 = vmatprep.mubr.bf16.mxu0 0
        %2600 = vmatmul.mubr.bf16.gmra.mrb[0].mxu0 %v2387
        %v2601 = vpop.f32.mrb[0].mxu0
        %v2602 = vadd.f32 %v2413, %v2601
        %v2603 = vpop.f32.mrb[0].mxu0
        %v2604 = vpop.f32.mrb[0].mxu0
        %v2605 = vadd.f32 %v2413, %v2604
        %v2606 = vpop.f32.mrb[0].mxu0
        %2607 = vmatprep.mubr.bf16.mxu0 0
        %2608 = vmatmul.mubr.bf16.gmra.mrb[0].mxu0 %v2388
        %v2609 = vpop.f32.mrb[0].mxu0
        %v2610 = vadd.f32 %v2413, %v2609
        %v2611 = vpop.f32.mrb[0].mxu0
        %v2612 = vpop.f32.mrb[0].mxu0
        %v2613 = vadd.f32 %v2413, %v2612
        %v2614 = vpop.f32.mrb[0].mxu0
        %2615 = vmatprep.mubr.bf16.mxu0 0
        %2616 = vmatmul.mubr.bf16.gmra.mrb[0].mxu0 %v2389
        %v2617 = vpop.f32.mrb[0].mxu0
        %v2618 = vadd.f32 %v2413, %v2617
        %v2619 = vpop.f32.mrb[0].mxu0
        %v2620 = vpop.f32.mrb[0].mxu0
        %v2621 = vadd.f32 %v2413, %v2620
        %v2622 = vpop.f32.mrb[0].mxu0
        %2623 = vdwg.mxu0
        %2624 = vst [vmem:[%s269] sm:$0xff] %v2498
        %2625 = vst [vmem:[%s269 + $0x8] sm:$0xff] %v2501
        %2626 = vst [vmem:[%s269 + $0x10] sm:$0xff] %v2506
        %2627 = vst [vmem:[%s269 + $0x18] sm:$0xff] %v2509
        %2628 = vst [vmem:[%s269 + $0x20] sm:$0xff] %v2514
        %2629 = vst [vmem:[%s269 + $0x28] sm:$0xff] %v2517
        %2630 = vst [vmem:[%s269 + $0x30] sm:$0xff] %v2522
        %2631 = vst [vmem:[%s269 + $0x38] sm:$0xff] %v2525
        %2632 = vst [vmem:[%s269 + $0x40] sm:$0xff] %v2530
        %2633 = vst [vmem:[%s269 + $0x48] sm:$0xff] %v2533
        %2634 = vst [vmem:[%s269 + $0x50] sm:$0xff] %v2538
        %2635 = vst [vmem:[%s269 + $0x58] sm:$0xff] %v2541
        %2636 = vst [vmem:[%s269 + $0x60] sm:$0xff] %v2546
        %2637 = vst [vmem:[%s269 + $0x68] sm:$0xff] %v2549
        %2638 = vst [vmem:[%s269 + $0x70] sm:$0xff] %v2554
        %2639 = vst [vmem:[%s269 + $0x78] sm:$0xff] %v2557
        %2640 = vst [vmem:[%s269 + $0x80] sm:$0xff] %v2562
        %2641 = vst [vmem:[%s269 + $0x88] sm:$0xff] %v2565
        %2642 = vst [vmem:[%s269 + $0x90] sm:$0xff] %v2570
        %2643 = vst [vmem:[%s269 + $0x98] sm:$0xff] %v2573
        %2644 = vst [vmem:[%s269 + $0xa0] sm:$0xff] %v2578
        %2645 = vst [vmem:[%s269 + $0xa8] sm:$0xff] %v2581
        %2646 = vst [vmem:[%s269 + $0xb0] sm:$0xff] %v2586
        %2647 = vst [vmem:[%s269 + $0xb8] sm:$0xff] %v2589
        %2648 = vst [vmem:[%s269 + $0xc0] sm:$0xff] %v2594
        %2649 = vst [vmem:[%s269 + $0xc8] sm:$0xff] %v2597
        %2650 = vst [vmem:[%s269 + $0xd0] sm:$0xff] %v2602
        %2651 = vst [vmem:[%s269 + $0xd8] sm:$0xff] %v2605
        %2652 = vst [vmem:[%s269 + $0xe0] sm:$0xff] %v2610
        %2653 = vst [vmem:[%s269 + $0xe8] sm:$0xff] %v2613
        %2654 = vst [vmem:[%s269 + $0xf0] sm:$0xff] %v2618
        %2655 = vst [vmem:[%s269 + $0xf8] sm:$0xff] %v2621
        %s2656 = scalar_lea.vmem %s269, 256 [#allocation8]
        %2657 = vst [vmem:[%s2656] sm:$0xff] %v1024
        %2658 = vst [vmem:[%s2656 + $0x8] sm:$0xff] %v1027
        %2659 = vst [vmem:[%s2656 + $0x10] sm:$0xff] %v1032
        %2660 = vst [vmem:[%s2656 + $0x18] sm:$0xff] %v1035
        %2661 = vst [vmem:[%s2656 + $0x20] sm:$0xff] %v1040
        %2662 = vst [vmem:[%s2656 + $0x28] sm:$0xff] %v1043
        %2663 = vst [vmem:[%s2656 + $0x30] sm:$0xff] %v1048
        %2664 = vst [vmem:[%s2656 + $0x38] sm:$0xff] %v1051
        %2665 = vst [vmem:[%s2656 + $0x40] sm:$0xff] %v1056
        %2666 = vst [vmem:[%s2656 + $0x48] sm:$0xff] %v1059
        %2667 = vst [vmem:[%s2656 + $0x50] sm:$0xff] %v1064
        %2668 = vst [vmem:[%s2656 + $0x58] sm:$0xff] %v1067
        %2669 = vst [vmem:[%s2656 + $0x60] sm:$0xff] %v1072
        %2670 = vst [vmem:[%s2656 + $0x68] sm:$0xff] %v1075
        %2671 = vst [vmem:[%s2656 + $0x70] sm:$0xff] %v1080
        %2672 = vst [vmem:[%s2656 + $0x78] sm:$0xff] %v1083
        %2673 = vst [vmem:[%s2656 + $0x80] sm:$0xff] %v1088
        %2674 = vst [vmem:[%s2656 + $0x88] sm:$0xff] %v1091
        %2675 = vst [vmem:[%s2656 + $0x90] sm:$0xff] %v1096
        %2676 = vst [vmem:[%s2656 + $0x98] sm:$0xff] %v1099
        %2677 = vst [vmem:[%s2656 + $0xa0] sm:$0xff] %v1104
        %2678 = vst [vmem:[%s2656 + $0xa8] sm:$0xff] %v1107
        %2679 = vst [vmem:[%s2656 + $0xb0] sm:$0xff] %v1112
        %2680 = vst [vmem:[%s2656 + $0xb8] sm:$0xff] %v1115
        %2681 = vst [vmem:[%s2656 + $0xc0] sm:$0xff] %v1120
        %2682 = vst [vmem:[%s2656 + $0xc8] sm:$0xff] %v1123
        %2683 = vst [vmem:[%s2656 + $0xd0] sm:$0xff] %v1128
        %2684 = vst [vmem:[%s2656 + $0xd8] sm:$0xff] %v1131
        %2685 = vst [vmem:[%s2656 + $0xe0] sm:$0xff] %v1136
        %2686 = vst [vmem:[%s2656 + $0xe8] sm:$0xff] %v1139
        %2687 = vst [vmem:[%s2656 + $0xf0] sm:$0xff] %v1144
        %2688 = vst [vmem:[%s2656 + $0xf8] sm:$0xff] %v1147
        %s2689 = scalar_lea.vmem %s269, 512 [#allocation8]
        %2690 = vst [vmem:[%s2689] sm:$0xff] %v1258
        %2691 = vst [vmem:[%s2689 + $0x8] sm:$0xff] %v1261
        %2692 = vst [vmem:[%s2689 + $0x10] sm:$0xff] %v1266
        %2693 = vst [vmem:[%s2689 + $0x18] sm:$0xff] %v1269
        %2694 = vst [vmem:[%s2689 + $0x20] sm:$0xff] %v1274
        %2695 = vst [vmem:[%s2689 + $0x28] sm:$0xff] %v1277
        %2696 = vst [vmem:[%s2689 + $0x30] sm:$0xff] %v1282
        %2697 = vst [vmem:[%s2689 + $0x38] sm:$0xff] %v1285
        %2698 = vst [vmem:[%s2689 + $0x40] sm:$0xff] %v1290
        %2699 = vst [vmem:[%s2689 + $0x48] sm:$0xff] %v1293
        %2700 = vst [vmem:[%s2689 + $0x50] sm:$0xff] %v1298
        %2701 = vst [vmem:[%s2689 + $0x58] sm:$0xff] %v1301
        %2702 = vst [vmem:[%s2689 + $0x60] sm:$0xff] %v1306
        %2703 = vst [vmem:[%s2689 + $0x68] sm:$0xff] %v1309
        %2704 = vst [vmem:[%s2689 + $0x70] sm:$0xff] %v1314
        %2705 = vst [vmem:[%s2689 + $0x78] sm:$0xff] %v1317
        %2706 = vst [vmem:[%s2689 + $0x80] sm:$0xff] %v1322
        %2707 = vst [vmem:[%s2689 + $0x88] sm:$0xff] %v1325
        %2708 = vst [vmem:[%s2689 + $0x90] sm:$0xff] %v1330
        %2709 = vst [vmem:[%s2689 + $0x98] sm:$0xff] %v1333
        %2710 = vst [vmem:[%s2689 + $0xa0] sm:$0xff] %v1338
        %2711 = vst [vmem:[%s2689 + $0xa8] sm:$0xff] %v1341
        %2712 = vst [vmem:[%s2689 + $0xb0] sm:$0xff] %v1346
        %2713 = vst [vmem:[%s2689 + $0xb8] sm:$0xff] %v1349
        %2714 = vst [vmem:[%s2689 + $0xc0] sm:$0xff] %v1354
        %2715 = vst [vmem:[%s2689 + $0xc8] sm:$0xff] %v1357
        %2716 = vst [vmem:[%s2689 + $0xd0] sm:$0xff] %v1362
        %2717 = vst [vmem:[%s2689 + $0xd8] sm:$0xff] %v1365
        %2718 = vst [vmem:[%s2689 + $0xe0] sm:$0xff] %v1370
        %2719 = vst [vmem:[%s2689 + $0xe8] sm:$0xff] %v1373
        %2720 = vst [vmem:[%s2689 + $0xf0] sm:$0xff] %v1378
        %2721 = vst [vmem:[%s2689 + $0xf8] sm:$0xff] %v1381
        %s2722 = sand.u32 %s126, 1
        %s2723 = scalar_lea.sflag [#allocation4], %s2722
        %s2724 = sand.u32 %s126, 1
        %s2725 = smul.addr %s2724, 768
        %s2726 = scalar_lea.vmem [#allocation8], %s2725
        // Predicated region
        $region49: #{tpu_custom_call.1} parent=35 // pred_check
          %p2727 = pneg %p136
        $region50: #{tpu_custom_call.1} parent=35 // pred_check_branch
          %2729 = sbr.rel (%p2727) target = $region52
        $region51: #{tpu_custom_call.1} parent=35 // pred_region
          #allocation10 [shape = 'u32[6]{0}', space=smem, size = 0x18, scoped, tag = 'DMA stride descriptor']
          %s2730 = smul.u32 32, %s24
          %s2732 = ssub.s32 12288, 12288
          %2733 = vsyncadd %s2723, %s2732
          %s2734 = smul.addr %s2730, 128
          %s2735 = scalar_lea.hbm %s4, %s2734
          %s2737 = sshll.u32 1, 14
          %s2738 = sxor.u32 4294967295, %s2737
          %s2741 = sshll.u32 7, 18
          %s2742 = sxor.u32 4294967295, %s2741
          %s2743 = sand.u32 0, %s2742
          %s2745 = sor.u32 %s2743, 0
          %s2747 = sshll.u32 3, 24
          %s2748 = sxor.u32 4294967295, %s2747
          %s2749 = sand.u32 %s2745, %s2748
          %s2751 = sor.u32 %s2749, 0
          %s2752 = sshll.u32 %s2726, 4
          %s2753 = int_to_ptr.vmem [resolvable:$true] %s2752
          %2759 = sst [smem:[#allocation10]] 4096
          %s2760 = scalar_lea.smem [#allocation10], 1
          %2761 = sst [smem:[%s2760]] 8192
          %s2762 = scalar_lea.smem [#allocation10], 2
          %2763 = sst [smem:[%s2762]] 32
          %s2764 = scalar_lea.smem [#allocation10], 3
          %2765 = sst [smem:[%s2764]] 128
          %s2766 = scalar_lea.smem [#allocation10], 4
          %2767 = sst [smem:[%s2766]] 128
          %s2768 = scalar_lea.smem [#allocation10], 5
          %2769 = sst [smem:[%s2768]] 8
          %2771 = dma.general %s2753, 12288, %s2735, %s2723, [#allocation9], [#allocation10], %s2751, 0
        $region52: #{tpu_custom_call.1} parent=35 // pred_fallthru
          _
      $region36: #{tpu_custom_call.1} parent=5 // pred_fallthru
        _
      %p2772 = scmp.le.s32.totalorder 2, %s19
      // Predicated region
      $region53: #{tpu_custom_call.1} parent=5 // pred_check
        %p2773 = pneg %p2772
      $region54: #{tpu_custom_call.1} parent=5 // pred_check_branch
        %2775 = sbr.rel (%p2773) target = $region56
      $region55: #{tpu_custom_call.1} parent=5 // pred_region
        %s2776 = ssub.s32 %s19, 2
        // Predicated region
        $region57: #{tpu_custom_call.1} parent=55 // pred_check
          %p2777 = pneg %p142
        $region58: #{tpu_custom_call.1} parent=55 // pred_check_branch
          %2779 = sbr.rel (%p2777) target = $region60
        $region59: #{tpu_custom_call.1} parent=55 // pred_region
          %s2780 = sand.u32 %s127, 1
          %s2781 = scalar_lea.sflag [#allocation4], %s2780
          %s2782 = sand.u32 %s127, 1
          %s2783 = smul.addr %s2782, 768
          %s2784 = scalar_lea.vmem [#allocation8], %s2783
          %2785 = dma.done %s2781, 12288
        $region60: #{tpu_custom_call.1} parent=55 // pred_fallthru
          _
      $region56: #{tpu_custom_call.1} parent=5 // pred_fallthru
        _
    $region6: #{tpu_custom_call.1} parent=1 // loop_footer
      %s23 = sadd.s32 1, %s19
    $region7: #{tpu_custom_call.1} parent=1 // loop_footer_branch
      %18 = sbr.rel target = $region3
    $region8: #{tpu_custom_call.1} parent=1 // loop_exit
      _
    %2786 = vsyncpa [#allocation3], 1
    %s2787 = scalar_lea.sflag [#allocation3], 1
    %2788 = vsyncpa %s2787, 1
    %2789 = vsyncpa [#allocation6], 1
    %s2790 = scalar_lea.sflag [#allocation6], 1
    %2791 = vsyncpa %s2790, 1
    %2792 = vsyncpa [#allocation4], 1
    %s2793 = scalar_lea.sflag [#allocation4], 1
    %2794 = vsyncpa %s2793, 1

</llo_original>
